<compile_context>
chip_gen: v5e
topology: v5e:2x2
jax: 0.10.0
libtpu: 0.0.40
codegen_flags: <defaults>
</compile_context>

<pallas_src>
import functools
import math

import jax
import jax.numpy as jnp
from jax.experimental import pallas as pl
from jax.experimental.pallas import tpu as pltpu

BN_EPS = 1e-5
VMEM_LIMIT = 48 * 1024 * 1024  # < 64 MiB physical VMEM on v7x


def _round_up(x, m):
    return (x + m - 1) // m * m


def _pick_tiles(m, k, n):
    """MXU-aligned tile sizes + padded GEMM dims (256-shaped, 128-compatible)."""
    tm = 256 if m >= 256 else _round_up(m, 16)   # 16-aligned for bf16 sublanes
    mp = _round_up(m, tm)
    kp = _round_up(k, 128)
    tk = 256 if kp % 256 == 0 else 128
    np_ = _round_up(n, 128)
    tn = 256 if np_ % 256 == 0 else 128
    return tm, tk, tn, mp, kp, np_


def _pad2(a, mp, np_):
    m, n = a.shape
    if m == mp and n == np_:
        return a
    return jnp.pad(a, ((0, mp - m), (0, np_ - n)))


def _pad1(v, n):
    v = v.astype(jnp.float32)
    if v.shape[0] == n:
        return v
    return jnp.pad(v, (0, n - v.shape[0]))


def _compiler_params(dims):
    return pltpu.CompilerParams(
        dimension_semantics=dims,
        vmem_limit_bytes=VMEM_LIMIT,
    )


# --------------------------------------------------------------------------
# Pallas kernels
# --------------------------------------------------------------------------
def _matmul_stats_kernel(a_ref, b_ref, y_ref, s_ref, acc_ref):
    """Tiled bf16 matmul with f32 accumulator; also emits per-tile channel
    sum / sum-of-squares (rows 0/1 of an 8-row stats block) for BatchNorm."""
    k = pl.program_id(2)

    @pl.when(k == 0)
    def _init():
        acc_ref[...] = jnp.zeros_like(acc_ref)

    acc_ref[...] += jnp.dot(a_ref[...], b_ref[...],
                            preferred_element_type=jnp.float32)

    @pl.when(k == pl.num_programs(2) - 1)
    def _finalize():
        y = acc_ref[...]
        y_ref[...] = y
        col_sum = jnp.sum(y, axis=0, keepdims=True)          # (1, tn)
        col_sumsq = jnp.sum(y * y, axis=0, keepdims=True)    # (1, tn)
        pad = jnp.zeros((6, col_sum.shape[1]), jnp.float32)
        s_ref[0] = jnp.concatenate([col_sum, col_sumsq, pad], axis=0)


def _make_bn_act_kernel(do_relu, has_residual):
    """Elementwise: y*scale + shift (+residual) (+ReLU), cast to out dtype."""

    def kernel(*refs):
        if has_residual:
            y_ref, sc_ref, sh_ref, r_ref, o_ref = refs
        else:
            y_ref, sc_ref, sh_ref, o_ref = refs
            r_ref = None
        out = y_ref[...] * sc_ref[...] + sh_ref[...]
        if has_residual:
            out = out + r_ref[...].astype(jnp.float32)
        if do_relu:
            out = jnp.maximum(out, 0.0)
        o_ref[...] = out.astype(o_ref.dtype)

    return kernel


def _matmul_bias_kernel(a_ref, b_ref, bias_ref, o_ref, acc_ref):
    k = pl.program_id(2)

    @pl.when(k == 0)
    def _init():
        acc_ref[...] = jnp.zeros_like(acc_ref)

    acc_ref[...] += jnp.dot(a_ref[...], b_ref[...],
                            preferred_element_type=jnp.float32)

    @pl.when(k == pl.num_programs(2) - 1)
    def _finalize():
        o_ref[...] = acc_ref[...] + bias_ref[...]


# --------------------------------------------------------------------------
# Fused conv (as GEMM) + BatchNorm (batch stats) + residual + ReLU
# --------------------------------------------------------------------------
def conv_bn(patches, w_flat, gamma, beta, residual=None, do_relu=True,
            out_dtype=jnp.bfloat16):
    m, k = patches.shape
    k2, c = w_flat.shape
    assert k == k2
    tm, tk, tn, mp, kp, cp = _pick_tiles(m, k, c)
    n_m, n_n, n_k = mp // tm, cp // tn, kp // tk

    a = _pad2(patches.astype(jnp.bfloat16), mp, kp)
    b = _pad2(w_flat.astype(jnp.bfloat16), kp, cp)

    # ---- pass 1: tiled matmul + per-tile channel stats ----
    y_pad, stats = pl.pallas_call(
        _matmul_stats_kernel,
        out_shape=(jax.ShapeDtypeStruct((mp, cp), jnp.float32),
                   jax.ShapeDtypeStruct((n_m, 8, cp), jnp.float32)),
        grid_spec=pltpu.PrefetchScalarGridSpec(
            num_scalar_prefetch=0,
            grid=(n_m, n_n, n_k),
            in_specs=[pl.BlockSpec((tm, tk), lambda i, j, kk: (i, kk)),
                      pl.BlockSpec((tk, tn), lambda i, j, kk: (kk, j))],
            out_specs=[pl.BlockSpec((tm, tn), lambda i, j, kk: (i, j)),
                       pl.BlockSpec((1, 8, tn), lambda i, j, kk: (i, 0, j))],
            scratch_shapes=[pltpu.VMEM((tm, tn), jnp.float32)]),
        compiler_params=_compiler_params(("parallel", "parallel", "arbitrary")),
    )(a, b)

    # ---- global batch statistics -> per-channel scale / shift (tiny, JAX) ----
    # Padded rows/channels are zero, so sums are unaffected; divide by real M.
    col_sum = jnp.sum(stats[:, 0, :], axis=0)
    col_sumsq = jnp.sum(stats[:, 1, :], axis=0)
    mean = col_sum / float(m)
    var = jnp.maximum(col_sumsq / float(m) - mean * mean, 0.0)
    g = _pad1(gamma, cp)
    bt = _pad1(beta, cp)
    scale_v = g * jax.lax.rsqrt(var + BN_EPS)
    shift_v = bt - mean * scale_v
    scale = scale_v.reshape(1, cp)
    shift = shift_v.reshape(1, cp)

    # ---- pass 2: tiled elementwise BN apply (+residual) (+ReLU) ----
    args = [y_pad, scale, shift]
    in_specs = [pl.BlockSpec((tm, cp), lambda i: (i, 0)),
                pl.BlockSpec((1, cp), lambda i: (0, 0)),
                pl.BlockSpec((1, cp), lambda i: (0, 0))]
    if residual is not None:
        r = _pad2(residual.astype(jnp.bfloat16), mp, cp)
        args.append(r)
        in_specs.append(pl.BlockSpec((tm, cp), lambda i: (i, 0)))

    out_pad = pl.pallas_call(
        _make_bn_act_kernel(do_relu, residual is not None),
        out_shape=jax.ShapeDtypeStruct((mp, cp), out_dtype),
        grid_spec=pltpu.PrefetchScalarGridSpec(
            num_scalar_prefetch=0,
            grid=(n_m,),
            in_specs=in_specs,
            out_specs=pl.BlockSpec((tm, cp), lambda i: (i, 0))),
        compiler_params=_compiler_params(("parallel",)),
    )(*args)

    return out_pad[:m, :c]


# --------------------------------------------------------------------------
# Tiled Linear (matmul + bias), classifier padded to a 128-multiple width
# --------------------------------------------------------------------------
def linear(x, w_t, bias):
    m, k = x.shape
    k2, n = w_t.shape
    assert k == k2
    tm, tk, tn, mp, kp, np_ = _pick_tiles(m, k, n)
    n_m, n_n, n_k = mp // tm, np_ // tn, kp // tk

    a = _pad2(x.astype(jnp.bfloat16), mp, kp)
    w = _pad2(w_t.astype(jnp.bfloat16), kp, np_)
    b2 = _pad1(bias, np_).reshape(1, np_)

    out = pl.pallas_call(
        _matmul_bias_kernel,
        out_shape=jax.ShapeDtypeStruct((mp, np_), jnp.float32),
        grid_spec=pltpu.PrefetchScalarGridSpec(
            num_scalar_prefetch=0,
            grid=(n_m, n_n, n_k),
            in_specs=[pl.BlockSpec((tm, tk), lambda i, j, kk: (i, kk)),
                      pl.BlockSpec((tk, tn), lambda i, j, kk: (kk, j)),
                      pl.BlockSpec((1, tn), lambda i, j, kk: (0, j))],
            out_specs=pl.BlockSpec((tm, tn), lambda i, j, kk: (i, j)),
            scratch_shapes=[pltpu.VMEM((tm, tn), jnp.float32)]),
        compiler_params=_compiler_params(("parallel", "parallel", "arbitrary")),
    )(a, w, b2)
    return out[:m, :n]


# --------------------------------------------------------------------------
# JAX glue: im2col patch extraction and memory-bound pooling
# --------------------------------------------------------------------------
def im2col(x, kh, kw, stride, pad):
    n, h, w, c = x.shape
    ho = (h + 2 * pad - kh) // stride + 1
    wo = (w + 2 * pad - kw) // stride + 1
    if pad > 0:
        x = jnp.pad(x, ((0, 0), (pad, pad), (pad, pad), (0, 0)))
    cols = []
    for i in range(kh):
        for j in range(kw):
            cols.append(x[:, i:i + stride * ho:stride, j:j + stride * wo:stride, :])
    patches = jnp.concatenate(cols, axis=-1)  # (n, ho, wo, kh*kw*c)
    return patches.reshape(n * ho * wo, kh * kw * c), (n, ho, wo)


def maxpool2d_3x3_s2_p1(x):
    # Running max over 9 shifted slices; XLA fuses this memory-bound op and
    # avoids materializing a (9, M, C) HBM tensor (per the perf review).
    n, h, w, c = x.shape
    ho = (h + 2 - 3) // 2 + 1
    wo = (w + 2 - 3) // 2 + 1
    xp = jnp.pad(x, ((0, 0), (1, 1), (1, 1), (0, 0)),
                 constant_values=-jnp.inf)
    out = None
    for i in range(3):
        for j in range(3):
            s = xp[:, i:i + 2 * ho:2, j:j + 2 * wo:2, :]
            out = s if out is None else jnp.maximum(out, s)
    return out


# --------------------------------------------------------------------------
# Model pieces
# --------------------------------------------------------------------------
@jax.jit
def stem_forward(x_nchw, params):
    x = jnp.transpose(x_nchw, (0, 2, 3, 1)).astype(jnp.bfloat16)  # NCHW -> NHWC
    p, (n, h, w) = im2col(x, 7, 7, 2, 3)
    y = conv_bn(p, params["w"].reshape(49 * 3, 64), params["g"], params["b"],
                do_relu=True)
    y = y.reshape(n, h, w, 64)
    return maxpool2d_3x3_s2_p1(y)


@functools.partial(jax.jit, static_argnames=("stride", "downsample"))
def bottleneck_forward(x, params, stride, downsample):
    n, h, w, cin = x.shape
    out1 = params["w1"].shape[-1]
    out2 = params["w3"].shape[-1]

    # conv1: 1x1, stride (im2col == strided reshape, no blow-up)
    p1, (_, h1, w1) = im2col(x, 1, 1, stride, 0)
    y = conv_bn(p1, params["w1"].reshape(cin, out1),
                params["g1"], params["b1"], do_relu=True)

    # conv2: 3x3, stride 1, pad 1
    y = y.reshape(n, h1, w1, out1)
    p2, _ = im2col(y, 3, 3, 1, 1)
    y = conv_bn(p2, params["w2"].reshape(9 * out1, out1),
                params["g2"], params["b2"], do_relu=True)

    # identity / projection branch
    if downsample:
        pi, _ = im2col(x, 1, 1, stride, 0)
        identity = conv_bn(pi, params["wp"].reshape(cin, out2),
                           params["gp"], params["bp"], do_relu=False)
    else:
        identity = x.reshape(n * h * w, cin)

    # conv3: 1x1, fused with bn3 + residual add + relu in the apply kernel
    y = conv_bn(y, params["w3"].reshape(out1, out2),
                params["g3"], params["b3"], residual=identity, do_relu=True)
    return y.reshape(n, h1, w1, out2)


@jax.jit
def head_forward(x, w_t, b):
    # AdaptiveAvgPool2d((1,1)) -> flatten (spatial mean, trivially memory-bound)
    feat = jnp.mean(x.astype(jnp.float32), axis=(1, 2))
    return linear(feat, w_t, b)


# --------------------------------------------------------------------------
# Deterministic parameter construction (matches module shapes / torch init)
# --------------------------------------------------------------------------
class KeyGen:
    def __init__(self, seed):
        self.key = jax.random.PRNGKey(seed)

    def __call__(self):
        self.key, sub = jax.random.split(self.key)
        return sub


def conv_weight(kg, kh, kw, cin, cout):
    fan_out = kh * kw * cout
    std = math.sqrt(2.0 / fan_out)  # kaiming_normal_, mode='fan_out', relu
    return jax.random.normal(kg(), (kh, kw, cin, cout), jnp.float32) * std


def bn_params(c):
    return jnp.ones((c,), jnp.float32), jnp.zeros((c,), jnp.float32)


def make_bottleneck_params(kg, cin, out1, out2, downsample):
    p = {}
    p["w1"] = conv_weight(kg, 1, 1, cin, out1)
    p["g1"], p["b1"] = bn_params(out1)
    p["w2"] = conv_weight(kg, 3, 3, out1, out1)
    p["g2"], p["b2"] = bn_params(out1)
    p["w3"] = conv_weight(kg, 1, 1, out1, out2)
    p["g3"], p["b3"] = bn_params(out2)
    if downsample:
        p["wp"] = conv_weight(kg, 1, 1, cin, out2)
        p["gp"], p["bp"] = bn_params(out2)
    return p


def make_stage(kg, num_blocks, cin, out1, out2, stride):
    blocks = [(make_bottleneck_params(kg, cin, out1, out2, True), stride, True)]
    for _ in range(1, num_blocks):
        blocks.append((make_bottleneck_params(kg, out2, out1, out2, False), 1, False))
    return blocks


def make_resnet152_params(seed=0):
    kg = KeyGen(seed)
    params = {"stem": {"w": conv_weight(kg, 7, 7, 3, 64)}}
    params["stem"]["g"], params["stem"]["b"] = bn_params(64)
    params["conv2x"] = make_stage(kg, 3, 64, 64, 256, 1)
    params["conv3x"] = make_stage(kg, 8, 256, 128, 512, 2)
    params["conv4x"] = make_stage(kg, 36, 512, 256, 1024, 2)
    params["conv5x"] = make_stage(kg, 3, 1024, 512, 2048, 2)
    bound = 1.0 / math.sqrt(2048.0)
    params["linear_w_t"] = jax.random.uniform(
        kg(), (2048, 1000), jnp.float32, -bound, bound)  # stored as W^T
    params["linear_b"] = jax.random.uniform(
        kg(), (1000,), jnp.float32, -bound, bound)
    return params


def resnet152_forward(x_nchw, params):
    y = stem_forward(x_nchw, params["stem"])
    for stage in ("conv2x", "conv3x", "conv4x", "conv5x"):
        for block_params, stride, downsample in params[stage]:
            y = bottleneck_forward(y, block_params, stride, downsample)
    return head_forward(y, params["linear_w_t"], params["linear_b"])


if __name__ == "__main__":
    key = jax.random.PRNGKey(0)
    x = jax.random.normal(key, (2, 3, 32, 32), jnp.float32)  # NCHW like torch
    params = make_resnet152_params(seed=0)
    out = resnet152_forward(x, params)
    out = jax.block_until_ready(out)
    assert out.shape == (2, 1000), out.shape
    assert bool(jnp.all(jnp.isfinite(out)))
    print("KERNEL_OK")
</pallas_src>

<mosaic_0001>
module attributes {stable_mosaic.version = 11 : i64} {
  func.func @_matmul_stats_kernel(%arg0: i32, %arg1: i32, %arg2: i32, %arg3: memref<256x256xbf16, #tpu.memory_space<vmem>>, %arg4: memref<256x128xbf16, #tpu.memory_space<vmem>>, %arg5: memref<256x128xf32, #tpu.memory_space<vmem>>, %arg6: memref<1x8x128xf32, #tpu.memory_space<vmem>>, %arg7: memref<256x128xf32, #tpu.memory_space<vmem>>) attributes {dimension_semantics = [#tpu.dimension_semantics<parallel>, #tpu.dimension_semantics<parallel>, #tpu.dimension_semantics<arbitrary>], iteration_bounds = array<i64: 2, 1, 1>, scalar_prefetch = 0 : i64, scratch_operands = 1 : i64, tpu.core_type = #tpu.core_type<tc>, window_params = [{transform_indices = @transform_0, window_bounds = array<i64: 256, 256>}, {transform_indices = @transform_1, window_bounds = array<i64: 256, 128>}, {transform_indices = @transform_2, window_bounds = array<i64: 256, 128>}, {transform_indices = @transform_3, window_bounds = array<i64: 1, 8, 128>}]} {
    %c0_i32 = arith.constant 0 : i32
    %0 = arith.cmpi eq, %arg2, %c0_i32 : i32
    %1 = arith.extui %0 : i1 to i32
    %c0_i32_0 = arith.constant 0 : i32
    %2 = arith.cmpi ne, %1, %c0_i32_0 : i32
    scf.if %2 {
      %cst_10 = arith.constant 0.000000e+00 : f32
      %12 = vector.broadcast %cst_10 : f32 to vector<256x128xf32>
      %c0_11 = arith.constant 0 : index
      %c0_12 = arith.constant 0 : index
      %13 = vector.load %arg7[%c0_11, %c0_12] : memref<256x128xf32, #tpu.memory_space<vmem>>, vector<256x128xf32>
      tpu.vector_store %arg7[%c0_11, %c0_12], %12 {strides = array<i32>} : memref<256x128xf32, #tpu.memory_space<vmem>>, vector<256x128xf32>,
    } else {
    }
    %c0 = arith.constant 0 : index
    %c0_1 = arith.constant 0 : index
    %3 = vector.load %arg7[%c0, %c0_1] : memref<256x128xf32, #tpu.memory_space<vmem>>, vector<256x128xf32>
    %c0_2 = arith.constant 0 : index
    %c0_3 = arith.constant 0 : index
    %4 = vector.load %arg3[%c0_2, %c0_3] : memref<256x256xbf16, #tpu.memory_space<vmem>>, vector<256x256xbf16>
    %c0_4 = arith.constant 0 : index
    %c0_5 = arith.constant 0 : index
    %5 = vector.load %arg4[%c0_4, %c0_5] : memref<256x128xbf16, #tpu.memory_space<vmem>>, vector<256x128xbf16>
    %cst = arith.constant dense<0.000000e+00> : vector<256x128xf32>
    %6 = tpu.matmul %4, %5, %cst {dimension_numbers = #tpu.dot_dimension_numbers<[1], [0], [0], [1], [0, 0, 1, 1], [], []>} : vector<256x256xbf16>, vector<256x128xbf16>, vector<256x128xf32> -> vector<256x128xf32>
    %7 = arith.addf %3, %6 : vector<256x128xf32>
    %c0_6 = arith.constant 0 : index
    %c0_7 = arith.constant 0 : index
    %8 = vector.load %arg7[%c0_6, %c0_7] : memref<256x128xf32, #tpu.memory_space<vmem>>, vector<256x128xf32>
    tpu.vector_store %arg7[%c0_6, %c0_7], %7 {strides = array<i32>} : memref<256x128xf32, #tpu.memory_space<vmem>>, vector<256x128xf32>,
    %c0_i32_8 = arith.constant 0 : i32
    %9 = arith.cmpi eq, %arg2, %c0_i32_8 : i32
    %10 = arith.extui %9 : i1 to i32
    %c0_i32_9 = arith.constant 0 : i32
    %11 = arith.cmpi ne, %10, %c0_i32_9 : i32
    scf.if %11 {
      %c0_10 = arith.constant 0 : index
      %c0_11 = arith.constant 0 : index
      %12 = vector.load %arg7[%c0_10, %c0_11] : memref<256x128xf32, #tpu.memory_space<vmem>>, vector<256x128xf32>
      %c0_12 = arith.constant 0 : index
      %c0_13 = arith.constant 0 : index
      %13 = vector.load %arg5[%c0_12, %c0_13] : memref<256x128xf32, #tpu.memory_space<vmem>>, vector<256x128xf32>
      tpu.vector_store %arg5[%c0_12, %c0_13], %12 {strides = array<i32>} : memref<256x128xf32, #tpu.memory_space<vmem>>, vector<256x128xf32>,
      %cst_14 = arith.constant dense<0.000000e+00> : vector<128xf32>
      %14 = vector.multi_reduction <add>, %12, %cst_14 [0] : vector<256x128xf32> to vector<128xf32>
      %15 = vector.shape_cast %14 : vector<128xf32> to vector<1x128xf32>
      %16 = arith.mulf %12, %12 : vector<256x128xf32>
      %cst_15 = arith.constant dense<0.000000e+00> : vector<128xf32>
      %17 = vector.multi_reduction <add>, %16, %cst_15 [0] : vector<256x128xf32> to vector<128xf32>
      %18 = vector.shape_cast %17 : vector<128xf32> to vector<1x128xf32>
      %cst_16 = arith.constant 0.000000e+00 : f32
      %19 = vector.broadcast %cst_16 : f32 to vector<6x128xf32>
      %20 = tpu.concatenate %15, %18, %19 in 0 : vector<1x128xf32>, vector<1x128xf32>, vector<6x128xf32> -> vector<8x128xf32>
      %c0_17 = arith.constant 0 : index
      %c0_18 = arith.constant 0 : index
      %c0_19 = arith.constant 0 : index
      %21 = vector.load %arg6[%c0_17, %c0_18, %c0_19] : memref<1x8x128xf32, #tpu.memory_space<vmem>>, vector<1x8x128xf32>
      %22 = vector.shape_cast %21 : vector<1x8x128xf32> to vector<8x128xf32>
      %23 = vector.shape_cast %20 : vector<8x128xf32> to vector<1x8x128xf32>
      tpu.vector_store %arg6[%c0_17, %c0_18, %c0_19], %23 {strides = array<i32>} : memref<1x8x128xf32, #tpu.memory_space<vmem>>, vector<1x8x128xf32>,
    } else {
    }
    return
  }
  func.func @transform_0(%arg0: i32, %arg1: i32, %arg2: i32) -> (i32, i32) {
    %c0_i32 = arith.constant 0 : i32
    return %arg0, %arg2 : i32, i32
  }
  func.func @transform_1(%arg0: i32, %arg1: i32, %arg2: i32) -> (i32, i32) {
    %c0_i32 = arith.constant 0 : i32
    return %arg2, %arg1 : i32, i32
  }
  func.func @transform_2(%arg0: i32, %arg1: i32, %arg2: i32) -> (i32, i32) {
    %c0_i32 = arith.constant 0 : i32
    return %arg0, %arg1 : i32, i32
  }
  func.func @transform_3(%arg0: i32, %arg1: i32, %arg2: i32) -> (i32, i32, i32) {
    %c0_i32 = arith.constant 0 : i32
    %c0_i32_0 = arith.constant 0 : i32
    return %arg0, %c0_i32, %arg1 : i32, i32, i32
  }
}

module attributes {stable_mosaic.version = 11 : i64} {
  func.func @kernel(%arg0: i32, %arg1: memref<256x128xf32, #tpu.memory_space<vmem>>, %arg2: memref<1x128xf32, #tpu.memory_space<vmem>>, %arg3: memref<1x128xf32, #tpu.memory_space<vmem>>, %arg4: memref<256x128xbf16, #tpu.memory_space<vmem>>) attributes {dimension_semantics = [#tpu.dimension_semantics<parallel>], iteration_bounds = array<i64: 2>, scalar_prefetch = 0 : i64, scratch_operands = 0 : i64, tpu.core_type = #tpu.core_type<tc>, window_params = [{transform_indices = @transform_0, window_bounds = array<i64: 256, 128>}, {pipeline_mode = #tpu.pipeline_mode<synchronous>, transform_indices = @transform_1, window_bounds = array<i64: 1, 128>}, {pipeline_mode = #tpu.pipeline_mode<synchronous>, transform_indices = @transform_2, window_bounds = array<i64: 1, 128>}, {transform_indices = @transform_3, window_bounds = array<i64: 256, 128>}]} {
    %c0 = arith.constant 0 : index
    %c0_0 = arith.constant 0 : index
    %0 = vector.load %arg1[%c0, %c0_0] : memref<256x128xf32, #tpu.memory_space<vmem>>, vector<256x128xf32>
    %c0_1 = arith.constant 0 : index
    %c0_2 = arith.constant 0 : index
    %1 = vector.load %arg2[%c0_1, %c0_2] : memref<1x128xf32, #tpu.memory_space<vmem>>, vector<1x128xf32>
    %2 = vector.broadcast %1 : vector<1x128xf32> to vector<256x128xf32>
    %3 = arith.mulf %0, %2 : vector<256x128xf32>
    %c0_3 = arith.constant 0 : index
    %c0_4 = arith.constant 0 : index
    %4 = vector.load %arg3[%c0_3, %c0_4] : memref<1x128xf32, #tpu.memory_space<vmem>>, vector<1x128xf32>
    %5 = vector.broadcast %4 : vector<1x128xf32> to vector<256x128xf32>
    %6 = arith.addf %3, %5 : vector<256x128xf32>
    %cst = arith.constant 0.000000e+00 : f32
    %7 = vector.broadcast %cst : f32 to vector<256x128xf32>
    %8 = arith.maximumf %6, %7 : vector<256x128xf32>
    %9 = arith.truncf %8 : vector<256x128xf32> to vector<256x128xbf16>
    %c0_5 = arith.constant 0 : index
    %c0_6 = arith.constant 0 : index
    %10 = vector.load %arg4[%c0_5, %c0_6] : memref<256x128xbf16, #tpu.memory_space<vmem>>, vector<256x128xbf16>
    tpu.vector_store %arg4[%c0_5, %c0_6], %9 {strides = array<i32>} : memref<256x128xbf16, #tpu.memory_space<vmem>>, vector<256x128xbf16>,
    return
  }
  func.func @transform_0(%arg0: i32) -> (i32, i32) {
    %c0_i32 = arith.constant 0 : i32
    %c0_i32_0 = arith.constant 0 : i32
    return %arg0, %c0_i32 : i32, i32
  }
  func.func @transform_1(%arg0: i32) -> (i32, i32) {
    %c0_i32 = arith.constant 0 : i32
    %c0_i32_0 = arith.constant 0 : i32
    %c0_i32_1 = arith.constant 0 : i32
    return %c0_i32, %c0_i32_0 : i32, i32
  }
  func.func @transform_2(%arg0: i32) -> (i32, i32) {
    %c0_i32 = arith.constant 0 : i32
    %c0_i32_0 = arith.constant 0 : i32
    %c0_i32_1 = arith.constant 0 : i32
    return %c0_i32, %c0_i32_0 : i32, i32
  }
  func.func @transform_3(%arg0: i32) -> (i32, i32) {
    %c0_i32 = arith.constant 0 : i32
    %c0_i32_0 = arith.constant 0 : i32
    return %arg0, %c0_i32 : i32, i32
  }
}

</mosaic_0001>

<llo_original>
// kernel: stem_forward.3
$region0: #{stem_forward.3}
  #allocation0 [shape = 'u32[]', space=smem, size = 0x4, offset = 0x4, fixed_abs, tag = 'smem constant byte address 0x4 - core index']
  #allocation1 [shape = 'u32[72,128]{1,0:T(1,128)}', space=vmem, size = 0x9000, scoped, tag = 'internal scratch']
  %s0 = inlined_call_operand.vmem [shape: f32[512,128], index: 0, kind: input, shape index: {}]
  %s1 = inlined_call_operand.vmem [shape: f32[1,128], index: 1, kind: input, shape index: {}]
  %s2 = inlined_call_operand.vmem [shape: f32[1,128], index: 2, kind: input, shape index: {}]
  %s3 = inlined_call_operand.vmem [shape: bf16[512,128], index: 3, kind: output, shape index: {}]
  %s4 = sld [smem:[#allocation0]]
  $region45: #{stem_forward.3} parent=0
    _
  %s6 = ssub.s32 1, %s4
  %s7 = scalar_select 0, %s6, %s4
  loop: start=0, step=1, limit=4
  $region2: #{stem_forward.3} parent=0 // loop_pre_header
    _
  $region3: #{stem_forward.3} parent=0 // loop_header
    %s9 = sphi 0, %s13
    %p10 = scmp.ge.s32.totalorder %s9, 4
    %s19 = sphi 0, %s21
    %s22 = sphi 0, %s19
    %s23 = sphi 0, %s22
    %s39 = sphi 0, %s23
    %s43 = sphi 0, %s43
    %s45 = sphi 0, %s43
    %s46 = sphi 0, %s45
    %s60 = sphi 0, %s46
    %s64 = sphi 0, %s64
    %s66 = sphi 0, %s64
    %s67 = sphi 0, %s66
    %s81 = sphi 0, %s67
    %s87 = sphi 0, %s89
    %s90 = sphi 0, %s87
    %s91 = sphi 0, %s90
    %s107 = sphi 0, %s91
  $region4: #{stem_forward.3} parent=0 // loop_header_branch
    %12 = sbr.rel (%p10) target = $region8
  $region5: #{stem_forward.3} parent=0 // loop_body
    %s14 = ssub.s32 %s9, 1
    %s15 = ssub.s32 %s9, 2
    %s16 = sadd.s32 %s9, 1
    %s17 = ssub.s32 %s9, %s16
    %p18 = scmp.eq.s32.totalorder %s17, 0
    %s20 = sadd.s32 %s19, 1
    %s21 = scalar_select %p18, %s19, %s20
    %p24 = pneg %p18
    %p25 = scmp.eq.s32.totalorder %s9, 1
    %p26 = por %p24, %p25
    %p27 = scmp.ne.s32.totalorder %s19, %s22
    %p28 = scmp.eq.s32.totalorder %s9, 0
    %p29 = por %p27, %p28
    %p30 = scmp.ne.s32.totalorder %s19, %s22
    %p31 = scmp.eq.s32.totalorder %s14, 1
    %p32 = por %p30, %p31
    %p33 = scmp.ne.s32.totalorder %s22, %s23
    %p34 = scmp.eq.s32.totalorder %s14, 0
    %p35 = por %p33, %p34
    %p36 = scmp.ne.s32.totalorder %s22, %s23
    %p37 = scmp.eq.s32.totalorder %s15, 1
    %p38 = por %p36, %p37
    %p40 = scmp.ne.s32.totalorder %s23, %s39
    %p41 = scmp.eq.s32.totalorder %s15, 0
    %p42 = por %p40, %p41
    %s44 = sadd.s32 %s43, 1
    %p47 = scmp.eq.s32.totalorder %s9, 1
    %p48 = scmp.ne.s32.totalorder %s43, %s45
    %p49 = scmp.eq.s32.totalorder %s9, 0
    %p50 = por %p48, %p49
    %p51 = scmp.ne.s32.totalorder %s43, %s45
    %p52 = scmp.eq.s32.totalorder %s14, 1
    %p53 = por %p51, %p52
    %p54 = scmp.ne.s32.totalorder %s45, %s46
    %p55 = scmp.eq.s32.totalorder %s14, 0
    %p56 = por %p54, %p55
    %p57 = scmp.ne.s32.totalorder %s45, %s46
    %p58 = scmp.eq.s32.totalorder %s15, 1
    %p59 = por %p57, %p58
    %p61 = scmp.ne.s32.totalorder %s46, %s60
    %p62 = scmp.eq.s32.totalorder %s15, 0
    %p63 = por %p61, %p62
    %s65 = sadd.s32 %s64, 1
    %p68 = scmp.eq.s32.totalorder %s9, 1
    %p69 = scmp.ne.s32.totalorder %s64, %s66
    %p70 = scmp.eq.s32.totalorder %s9, 0
    %p71 = por %p69, %p70
    %p72 = scmp.ne.s32.totalorder %s64, %s66
    %p73 = scmp.eq.s32.totalorder %s14, 1
    %p74 = por %p72, %p73
    %p75 = scmp.ne.s32.totalorder %s66, %s67
    %p76 = scmp.eq.s32.totalorder %s14, 0
    %p77 = por %p75, %p76
    %p78 = scmp.ne.s32.totalorder %s66, %s67
    %p79 = scmp.eq.s32.totalorder %s15, 1
    %p80 = por %p78, %p79
    %p82 = scmp.ne.s32.totalorder %s67, %s81
    %p83 = scmp.eq.s32.totalorder %s15, 0
    %p84 = por %p82, %p83
    %s85 = ssub.s32 %s9, %s16
    %p86 = scmp.eq.s32.totalorder %s85, 0
    %s88 = sadd.s32 %s87, 1
    %s89 = scalar_select %p86, %s87, %s88
    %p92 = pneg %p86
    %p93 = scmp.eq.s32.totalorder %s9, 1
    %p94 = por %p92, %p93
    %p95 = scmp.ne.s32.totalorder %s87, %s90
    %p96 = scmp.eq.s32.totalorder %s9, 0
    %p97 = por %p95, %p96
    %p98 = scmp.ne.s32.totalorder %s87, %s90
    %p99 = scmp.eq.s32.totalorder %s14, 1
    %p100 = por %p98, %p99
    %p101 = scmp.ne.s32.totalorder %s90, %s91
    %p102 = scmp.eq.s32.totalorder %s14, 0
    %p103 = por %p101, %p102
    %p104 = scmp.ne.s32.totalorder %s90, %s91
    %p105 = scmp.eq.s32.totalorder %s15, 1
    %p106 = por %p104, %p105
    %p108 = scmp.ne.s32.totalorder %s91, %s107
    %p109 = scmp.eq.s32.totalorder %s15, 0
    %p110 = por %p108, %p109
    %p111 = scmp.le.s32.totalorder 1, %s9
    %p112 = scmp.lt.s32.totalorder %s9, 3
    %p113 = pnand %p111, %p112
    %p114 = pneg %p113
    // Predicated region
    $region9: #{stem_forward.3} parent=5 // pred_check
      _
    $region10: #{stem_forward.3} parent=5 // pred_check_branch
      %116 = sbr.rel (%p113) target = $region12
    $region11: #{stem_forward.3} parent=5 // pred_region
      %s117 = ssub.s32 %s9, 1
      // Predicated region
      $region13: #{stem_forward.3} parent=11 // pred_check
        %p118 = pneg %p56
      $region14: #{stem_forward.3} parent=11 // pred_check_branch
        %120 = sbr.rel (%p118) target = $region16
      $region15: #{stem_forward.3} parent=11 // pred_region
        _
      $region16: #{stem_forward.3} parent=11 // pred_fallthru
        _
      // Predicated region
      $region17: #{stem_forward.3} parent=11 // pred_check
        %p121 = pneg %p77
      $region18: #{stem_forward.3} parent=11 // pred_check_branch
        %123 = sbr.rel (%p121) target = $region20
      $region19: #{stem_forward.3} parent=11 // pred_region
        _
      $region20: #{stem_forward.3} parent=11 // pred_fallthru
        _
    $region12: #{stem_forward.3} parent=5 // pred_fallthru
      _
    %p124 = scmp.lt.s32.totalorder %s9, 2
    // Predicated region
    $region21: #{stem_forward.3} parent=5 // pred_check
      %p125 = pneg %p124
    $region22: #{stem_forward.3} parent=5 // pred_check_branch
      %127 = sbr.rel (%p125) target = $region24
    $region23: #{stem_forward.3} parent=5 // pred_region
      // Predicated region
      $region25: #{stem_forward.3} parent=23 // pred_check
        %p128 = pneg %p29
      $region26: #{stem_forward.3} parent=23 // pred_check_branch
        %130 = sbr.rel (%p128) target = $region28
      $region27: #{stem_forward.3} parent=23 // pred_region
        %s131 = smul.u32 32, %s9
        %p132 = scmp.lt.s32.totalorder %s131, 63
        %s133 = scalar_select %p132, %s131, 63
        %s134 = smul.addr %s133, 8
        %s135 = scalar_lea.vmem %s0, %s134
        %s136 = smul.u32 32, %s9
      $region28: #{stem_forward.3} parent=23 // pred_fallthru
        _
    $region24: #{stem_forward.3} parent=5 // pred_fallthru
      _
    %p137 = scmp.le.s32.totalorder 1, %s9
    %p138 = scmp.lt.s32.totalorder %s9, 3
    %p139 = pnand %p137, %p138
    %p140 = pneg %p139
    // Predicated region
    $region29: #{stem_forward.3} parent=5 // pred_check
      _
    $region30: #{stem_forward.3} parent=5 // pred_check_branch
      %142 = sbr.rel (%p139) target = $region32
    $region31: #{stem_forward.3} parent=5 // pred_region
      %s143 = ssub.s32 %s9, 1
      %s144 = smul.u32 32, %s14
      %p145 = scmp.lt.s32.totalorder %s144, 63
      %s146 = scalar_select %p145, %s144, 63
      %s147 = smul.addr %s146, 8
      %s148 = scalar_lea.vmem %s0, %s147
      %p149 = pneg %p35
      %p150 = pneg %p32
      %p151 = pneg %p56
      %p152 = pneg %p53
      %p153 = pneg %p77
      %p154 = pneg %p74
      %p155 = pneg %p103
      %p156 = pneg %p100
      %s157 = smul.u32 32, %s14
      %p158 = scmp.lt.s32.totalorder %s157, 63
      %s159 = scalar_select %p158, %s157, 63
      %s160 = smul.addr %s159, 4
      %s161 = scalar_lea.vmem %s3, %s160
      %s162 = smul.u32 32, %s14
      %p163 = scmp.lt.s32.totalorder %s162, 63
      %s164 = scalar_select %p163, %s162, 63
      %s165 = smul.addr %s164, 8
      %s166 = scalar_lea.vmem %s0, %s165
      %s167 = smul.u32 32, %s14
      %s168 = smul.u32 32, %s14
      %p169 = scmp.lt.s32.totalorder %s168, 63
      %s170 = scalar_select %p169, %s168, 63
      %s171 = smul.addr %s170, 4
      %s172 = scalar_lea.vmem %s3, %s171
      %s173 = smul.u32 32, %s14
      %v174 = vld [vmem:[%s166] sm:$0xff]
      %v175 = vld [vmem:[%s166 + $0x8] sm:$0xff]
      %v176 = vld [vmem:[%s166 + $0x10] sm:$0xff]
      %v177 = vld [vmem:[%s166 + $0x18] sm:$0xff]
      %v178 = vld [vmem:[%s166 + $0x20] sm:$0xff]
      %v179 = vld [vmem:[%s166 + $0x28] sm:$0xff]
      %v180 = vld [vmem:[%s166 + $0x30] sm:$0xff]
      %v181 = vld [vmem:[%s166 + $0x38] sm:$0xff]
      %v182 = vld [vmem:[%s166 + $0x40] sm:$0xff]
      %v183 = vld [vmem:[%s166 + $0x48] sm:$0xff]
      %v184 = vld [vmem:[%s166 + $0x50] sm:$0xff]
      %v185 = vld [vmem:[%s166 + $0x58] sm:$0xff]
      %v186 = vld [vmem:[%s166 + $0x60] sm:$0xff]
      %v187 = vld [vmem:[%s166 + $0x68] sm:$0xff]
      %v188 = vld [vmem:[%s166 + $0x70] sm:$0xff]
      %v189 = vld [vmem:[%s166 + $0x78] sm:$0xff]
      %v190 = vld [vmem:[%s166 + $0x80] sm:$0xff]
      %v191 = vld [vmem:[%s166 + $0x88] sm:$0xff]
      %v192 = vld [vmem:[%s166 + $0x90] sm:$0xff]
      %v193 = vld [vmem:[%s166 + $0x98] sm:$0xff]
      %v194 = vld [vmem:[%s166 + $0xa0] sm:$0xff]
      %v195 = vld [vmem:[%s166 + $0xa8] sm:$0xff]
      %v196 = vld [vmem:[%s166 + $0xb0] sm:$0xff]
      %v197 = vld [vmem:[%s166 + $0xb8] sm:$0xff]
      %v198 = vld [vmem:[%s166 + $0xc0] sm:$0xff]
      %v199 = vld [vmem:[%s166 + $0xc8] sm:$0xff]
      %v200 = vld [vmem:[%s166 + $0xd0] sm:$0xff]
      %v201 = vld [vmem:[%s166 + $0xd8] sm:$0xff]
      %v202 = vld [vmem:[%s166 + $0xe0] sm:$0xff]
      %v203 = vld [vmem:[%s166 + $0xe8] sm:$0xff]
      %v204 = vld [vmem:[%s166 + $0xf0] sm:$0xff]
      %v205 = vld [vmem:[%s166 + $0xf8] sm:$0xff]
      %v206 = vld [vmem:[%s1] sm:$0x1]
      %v208 = vperm.slane %v206, 0
      %v210 = vmul.f32 %v174, %v208
      %v211 = vmul.f32 %v175, %v208
      %v212 = vmul.f32 %v176, %v208
      %v213 = vmul.f32 %v177, %v208
      %v214 = vmul.f32 %v178, %v208
      %v215 = vmul.f32 %v179, %v208
      %v216 = vmul.f32 %v180, %v208
      %v217 = vmul.f32 %v181, %v208
      %v218 = vmul.f32 %v182, %v208
      %v219 = vmul.f32 %v183, %v208
      %v220 = vmul.f32 %v184, %v208
      %v221 = vmul.f32 %v185, %v208
      %v222 = vmul.f32 %v186, %v208
      %v223 = vmul.f32 %v187, %v208
      %v224 = vmul.f32 %v188, %v208
      %v225 = vmul.f32 %v189, %v208
      %v226 = vmul.f32 %v190, %v208
      %v227 = vmul.f32 %v191, %v208
      %v228 = vmul.f32 %v192, %v208
      %v229 = vmul.f32 %v193, %v208
      %v230 = vmul.f32 %v194, %v208
      %v231 = vmul.f32 %v195, %v208
      %v232 = vmul.f32 %v196, %v208
      %v233 = vmul.f32 %v197, %v208
      %v234 = vmul.f32 %v198, %v208
      %v235 = vmul.f32 %v199, %v208
      %v236 = vmul.f32 %v200, %v208
      %v237 = vmul.f32 %v201, %v208
      %v238 = vmul.f32 %v202, %v208
      %v239 = vmul.f32 %v203, %v208
      %v240 = vmul.f32 %v204, %v208
      %v241 = vmul.f32 %v205, %v208
      %v242 = vld [vmem:[%s2] sm:$0x1]
      %v244 = vperm.slane %v242, 0
      %v246 = vadd.f32 %v210, %v244
      %v247 = vadd.f32 %v211, %v244
      %v248 = vadd.f32 %v212, %v244
      %v249 = vadd.f32 %v213, %v244
      %v250 = vadd.f32 %v214, %v244
      %v251 = vadd.f32 %v215, %v244
      %v252 = vadd.f32 %v216, %v244
      %v253 = vadd.f32 %v217, %v244
      %v254 = vadd.f32 %v218, %v244
      %v255 = vadd.f32 %v219, %v244
      %v256 = vadd.f32 %v220, %v244
      %v257 = vadd.f32 %v221, %v244
      %v258 = vadd.f32 %v222, %v244
      %v259 = vadd.f32 %v223, %v244
      %v260 = vadd.f32 %v224, %v244
      %v261 = vadd.f32 %v225, %v244
      %v262 = vadd.f32 %v226, %v244
      %v263 = vadd.f32 %v227, %v244
      %v264 = vadd.f32 %v228, %v244
      %v265 = vadd.f32 %v229, %v244
      %v266 = vadd.f32 %v230, %v244
      %v267 = vadd.f32 %v231, %v244
      %v268 = vadd.f32 %v232, %v244
      %v269 = vadd.f32 %v233, %v244
      %v270 = vadd.f32 %v234, %v244
      %v271 = vadd.f32 %v235, %v244
      %v272 = vadd.f32 %v236, %v244
      %v273 = vadd.f32 %v237, %v244
      %v274 = vadd.f32 %v238, %v244
      %v275 = vadd.f32 %v239, %v244
      %v276 = vadd.f32 %v240, %v244
      %v277 = vadd.f32 %v241, %v244
      %v278 = vmax.f32 %v246, 0.0
      %v279 = vmax.f32 %v247, 0.0
      %v280 = vmax.f32 %v248, 0.0
      %v281 = vmax.f32 %v249, 0.0
      %v282 = vmax.f32 %v250, 0.0
      %v283 = vmax.f32 %v251, 0.0
      %v284 = vmax.f32 %v252, 0.0
      %v285 = vmax.f32 %v253, 0.0
      %v286 = vmax.f32 %v254, 0.0
      %v287 = vmax.f32 %v255, 0.0
      %v288 = vmax.f32 %v256, 0.0
      %v289 = vmax.f32 %v257, 0.0
      %v290 = vmax.f32 %v258, 0.0
      %v291 = vmax.f32 %v259, 0.0
      %v292 = vmax.f32 %v260, 0.0
      %v293 = vmax.f32 %v261, 0.0
      %v294 = vmax.f32 %v262, 0.0
      %v295 = vmax.f32 %v263, 0.0
      %v296 = vmax.f32 %v264, 0.0
      %v297 = vmax.f32 %v265, 0.0
      %v298 = vmax.f32 %v266, 0.0
      %v299 = vmax.f32 %v267, 0.0
      %v300 = vmax.f32 %v268, 0.0
      %v301 = vmax.f32 %v269, 0.0
      %v302 = vmax.f32 %v270, 0.0
      %v303 = vmax.f32 %v271, 0.0
      %v304 = vmax.f32 %v272, 0.0
      %v305 = vmax.f32 %v273, 0.0
      %v306 = vmax.f32 %v274, 0.0
      %v307 = vmax.f32 %v275, 0.0
      %v308 = vmax.f32 %v276, 0.0
      %v309 = vmax.f32 %v277, 0.0
      %v310 = vpack.c.bf16 %v278, %v278
      %v311 = vpack.c.bf16 %v279, %v279
      %v312 = vpack.c.bf16 %v280, %v280
      %v313 = vpack.c.bf16 %v281, %v281
      %v314 = vpack.c.bf16 %v282, %v282
      %v315 = vpack.c.bf16 %v283, %v283
      %v316 = vpack.c.bf16 %v284, %v284
      %v317 = vpack.c.bf16 %v285, %v285
      %v318 = vpack.c.bf16 %v286, %v286
      %v319 = vpack.c.bf16 %v287, %v287
      %v320 = vpack.c.bf16 %v288, %v288
      %v321 = vpack.c.bf16 %v289, %v289
      %v322 = vpack.c.bf16 %v290, %v290
      %v323 = vpack.c.bf16 %v291, %v291
      %v324 = vpack.c.bf16 %v292, %v292
      %v325 = vpack.c.bf16 %v293, %v293
      %v326 = vpack.c.bf16 %v294, %v294
      %v327 = vpack.c.bf16 %v295, %v295
      %v328 = vpack.c.bf16 %v296, %v296
      %v329 = vpack.c.bf16 %v297, %v297
      %v330 = vpack.c.bf16 %v298, %v298
      %v331 = vpack.c.bf16 %v299, %v299
      %v332 = vpack.c.bf16 %v300, %v300
      %v333 = vpack.c.bf16 %v301, %v301
      %v334 = vpack.c.bf16 %v302, %v302
      %v335 = vpack.c.bf16 %v303, %v303
      %v336 = vpack.c.bf16 %v304, %v304
      %v337 = vpack.c.bf16 %v305, %v305
      %v338 = vpack.c.bf16 %v306, %v306
      %v339 = vpack.c.bf16 %v307, %v307
      %v340 = vpack.c.bf16 %v308, %v308
      %v341 = vpack.c.bf16 %v309, %v309
      %342 = vst [vmem:[%s172] sm:$0xf] %v310
      %343 = vst [vmem:[%s172 + $0x4] sm:$0xf] %v311
      %344 = vst [vmem:[%s172 + $0x8] sm:$0xf] %v312
      %345 = vst [vmem:[%s172 + $0xc] sm:$0xf] %v313
      %346 = vst [vmem:[%s172 + $0x10] sm:$0xf] %v314
      %347 = vst [vmem:[%s172 + $0x14] sm:$0xf] %v315
      %348 = vst [vmem:[%s172 + $0x18] sm:$0xf] %v316
      %349 = vst [vmem:[%s172 + $0x1c] sm:$0xf] %v317
      %350 = vst [vmem:[%s172 + $0x20] sm:$0xf] %v318
      %351 = vst [vmem:[%s172 + $0x24] sm:$0xf] %v319
      %352 = vst [vmem:[%s172 + $0x28] sm:$0xf] %v320
      %353 = vst [vmem:[%s172 + $0x2c] sm:$0xf] %v321
      %354 = vst [vmem:[%s172 + $0x30] sm:$0xf] %v322
      %355 = vst [vmem:[%s172 + $0x34] sm:$0xf] %v323
      %356 = vst [vmem:[%s172 + $0x38] sm:$0xf] %v324
      %357 = vst [vmem:[%s172 + $0x3c] sm:$0xf] %v325
      %358 = vst [vmem:[%s172 + $0x40] sm:$0xf] %v326
      %359 = vst [vmem:[%s172 + $0x44] sm:$0xf] %v327
      %360 = vst [vmem:[%s172 + $0x48] sm:$0xf] %v328
      %361 = vst [vmem:[%s172 + $0x4c] sm:$0xf] %v329
      %362 = vst [vmem:[%s172 + $0x50] sm:$0xf] %v330
      %363 = vst [vmem:[%s172 + $0x54] sm:$0xf] %v331
      %364 = vst [vmem:[%s172 + $0x58] sm:$0xf] %v332
      %365 = vst [vmem:[%s172 + $0x5c] sm:$0xf] %v333
      %366 = vst [vmem:[%s172 + $0x60] sm:$0xf] %v334
      %367 = vst [vmem:[%s172 + $0x64] sm:$0xf] %v335
      %368 = vst [vmem:[%s172 + $0x68] sm:$0xf] %v336
      %369 = vst [vmem:[%s172 + $0x6c] sm:$0xf] %v337
      %370 = vst [vmem:[%s172 + $0x70] sm:$0xf] %v338
      %371 = vst [vmem:[%s172 + $0x74] sm:$0xf] %v339
      %372 = vst [vmem:[%s172 + $0x78] sm:$0xf] %v340
      %373 = vst [vmem:[%s172 + $0x7c] sm:$0xf] %v341
      %s374 = smul.u32 32, %s14
      %p375 = scmp.lt.s32.totalorder %s374, 63
      %s376 = scalar_select %p375, %s374, 63
      %s377 = smul.addr %s376, 4
      %s378 = scalar_lea.vmem %s3, %s377
      // Predicated region
      $region33: #{stem_forward.3} parent=31 // pred_check
        %p379 = pneg %p100
      $region34: #{stem_forward.3} parent=31 // pred_check_branch
        %381 = sbr.rel (%p379) target = $region36
      $region35: #{stem_forward.3} parent=31 // pred_region
        %s382 = smul.u32 32, %s14
      $region36: #{stem_forward.3} parent=31 // pred_fallthru
        _
    $region32: #{stem_forward.3} parent=5 // pred_fallthru
      _
    %p383 = scmp.le.s32.totalorder 2, %s9
    // Predicated region
    $region37: #{stem_forward.3} parent=5 // pred_check
      %p384 = pneg %p383
    $region38: #{stem_forward.3} parent=5 // pred_check_branch
      %386 = sbr.rel (%p384) target = $region40
    $region39: #{stem_forward.3} parent=5 // pred_region
      %s387 = ssub.s32 %s9, 2
      // Predicated region
      $region41: #{stem_forward.3} parent=39 // pred_check
        %p388 = pneg %p106
      $region42: #{stem_forward.3} parent=39 // pred_check_branch
        %390 = sbr.rel (%p388) target = $region44
      $region43: #{stem_forward.3} parent=39 // pred_region
        %s391 = smul.u32 32, %s15
        %p392 = scmp.lt.s32.totalorder %s391, 63
        %s393 = scalar_select %p392, %s391, 63
        %s394 = smul.addr %s393, 4
        %s395 = scalar_lea.vmem %s3, %s394
      $region44: #{stem_forward.3} parent=39 // pred_fallthru
        _
    $region40: #{stem_forward.3} parent=5 // pred_fallthru
      _
  $region6: #{stem_forward.3} parent=0 // loop_footer
    %s13 = sadd.s32 1, %s9
  $region7: #{stem_forward.3} parent=0 // loop_footer_branch
    %8 = sbr.rel target = $region3
  $region8: #{stem_forward.3} parent=0 // loop_exit
    _

// kernel: stem_forward.2
$region0: #{stem_forward.2}
  #allocation0 [shape = 'u32[]', space=smem, size = 0x4, offset = 0x4, fixed_abs, tag = 'smem constant byte address 0x4 - core index']
  #allocation1 [shape = 'u32[72,128]{1,0:T(1,128)}', space=vmem, size = 0x9000, scoped, tag = 'internal scratch']
  #allocation2 [shape = 'f32[256,128]{1,0:T(8,128)}', space=vmem, size = 0x20000, scoped, tag = 'scratch operand']
  %s0 = inlined_call_operand.vmem [shape: bf16[512,256], index: 0, kind: input, shape index: {}]
  %s1 = inlined_call_operand.vmem [shape: bf16[256,128], index: 1, kind: input, shape index: {}]
  %s2 = inlined_call_operand.vmem [shape: f32[512,128], index: 2, kind: output, shape index: {0}]
  %s3 = inlined_call_operand.vmem [shape: f32[2,8,128], index: 3, kind: output, shape index: {1}]
  %4 = xla_tuple %s2, %s3
  %s5 = sld [smem:[#allocation0]]
  $region57: #{stem_forward.2} parent=0
    _
  %s7 = ssub.s32 1, %s5
  %s8 = scalar_select 0, %s7, %s5
  loop: start=0, step=1, limit=4
  $region2: #{stem_forward.2} parent=0 // loop_pre_header
    _
  $region3: #{stem_forward.2} parent=0 // loop_header
    %s10 = sphi 0, %s14
    %p11 = scmp.ge.s32.totalorder %s10, 4
    %s17 = sphi 0, %s36
    %s18 = sphi 0, %s32
    %s19 = sphi 0, %s28
    %s20 = sphi 0, %s17
    %s21 = sphi 0, %s18
    %s22 = sphi 0, %s19
    %s23 = sphi 0, %s20
    %s24 = sphi 0, %s21
    %s25 = sphi 0, %s22
    %s41 = sphi 0, %s43
    %s44 = sphi 0, %s41
    %s45 = sphi 0, %s44
    %s61 = sphi 0, %s45
    %s69 = sphi 0, %s71
    %s72 = sphi 0, %s69
    %s73 = sphi 0, %s72
    %s89 = sphi 0, %s73
    %s97 = sphi 0, %s99
    %s100 = sphi 0, %s97
    %s101 = sphi 0, %s100
    %s117 = sphi 0, %s101
    %s125 = sphi 0, %s127
    %s128 = sphi 0, %s125
    %s129 = sphi 0, %s128
    %s145 = sphi 0, %s129
  $region4: #{stem_forward.2} parent=0 // loop_header_branch
    %13 = sbr.rel (%p11) target = $region8
  $region5: #{stem_forward.2} parent=0 // loop_body
    %s15 = ssub.s32 %s10, 1
    %s16 = ssub.s32 %s10, 2
    %s26 = sadd.s32 1, %s19
    %p27 = scmp.ge.s32.totalorder %s26, 1
    %s28 = scalar_select %p27, 0, %s26
    %s29 = sadd.s32 1, %s18
    %s30 = scalar_select %p27, %s29, %s18
    %p31 = scmp.ge.s32.totalorder %s30, 1
    %s32 = scalar_select %p31, 0, %s30
    %s33 = sadd.s32 1, %s17
    %s34 = scalar_select %p31, %s33, %s17
    %p35 = scmp.ge.s32.totalorder %s34, 2
    %s36 = scalar_select %p35, 0, %s34
    %s37 = ssub.s32 %s17, %s36
    %s38 = ssub.s32 %s19, %s28
    %s39 = sor.u32 %s37, %s38
    %p40 = scmp.eq.s32.totalorder %s39, 0
    %s42 = sadd.s32 %s41, 1
    %s43 = scalar_select %p40, %s41, %s42
    %p46 = pneg %p40
    %p47 = scmp.eq.s32.totalorder %s10, 1
    %p48 = por %p46, %p47
    %p49 = scmp.ne.s32.totalorder %s41, %s44
    %p50 = scmp.eq.s32.totalorder %s10, 0
    %p51 = por %p49, %p50
    %p52 = scmp.ne.s32.totalorder %s41, %s44
    %p53 = scmp.eq.s32.totalorder %s15, 1
    %p54 = por %p52, %p53
    %p55 = scmp.ne.s32.totalorder %s44, %s45
    %p56 = scmp.eq.s32.totalorder %s15, 0
    %p57 = por %p55, %p56
    %p58 = scmp.ne.s32.totalorder %s44, %s45
    %p59 = scmp.eq.s32.totalorder %s16, 1
    %p60 = por %p58, %p59
    %p62 = scmp.ne.s32.totalorder %s45, %s61
    %p63 = scmp.eq.s32.totalorder %s16, 0
    %p64 = por %p62, %p63
    %s65 = ssub.s32 %s19, %s28
    %s66 = ssub.s32 %s18, %s32
    %s67 = sor.u32 %s65, %s66
    %p68 = scmp.eq.s32.totalorder %s67, 0
    %s70 = sadd.s32 %s69, 1
    %s71 = scalar_select %p68, %s69, %s70
    %p74 = pneg %p68
    %p75 = scmp.eq.s32.totalorder %s10, 1
    %p76 = por %p74, %p75
    %p77 = scmp.ne.s32.totalorder %s69, %s72
    %p78 = scmp.eq.s32.totalorder %s10, 0
    %p79 = por %p77, %p78
    %p80 = scmp.ne.s32.totalorder %s69, %s72
    %p81 = scmp.eq.s32.totalorder %s15, 1
    %p82 = por %p80, %p81
    %p83 = scmp.ne.s32.totalorder %s72, %s73
    %p84 = scmp.eq.s32.totalorder %s15, 0
    %p85 = por %p83, %p84
    %p86 = scmp.ne.s32.totalorder %s72, %s73
    %p87 = scmp.eq.s32.totalorder %s16, 1
    %p88 = por %p86, %p87
    %p90 = scmp.ne.s32.totalorder %s73, %s89
    %p91 = scmp.eq.s32.totalorder %s16, 0
    %p92 = por %p90, %p91
    %s93 = ssub.s32 %s17, %s36
    %s94 = ssub.s32 %s18, %s32
    %s95 = sor.u32 %s93, %s94
    %p96 = scmp.eq.s32.totalorder %s95, 0
    %s98 = sadd.s32 %s97, 1
    %s99 = scalar_select %p96, %s97, %s98
    %p102 = pneg %p96
    %p103 = scmp.eq.s32.totalorder %s10, 1
    %p104 = por %p102, %p103
    %p105 = scmp.ne.s32.totalorder %s97, %s100
    %p106 = scmp.eq.s32.totalorder %s10, 0
    %p107 = por %p105, %p106
    %p108 = scmp.ne.s32.totalorder %s97, %s100
    %p109 = scmp.eq.s32.totalorder %s15, 1
    %p110 = por %p108, %p109
    %p111 = scmp.ne.s32.totalorder %s100, %s101
    %p112 = scmp.eq.s32.totalorder %s15, 0
    %p113 = por %p111, %p112
    %p114 = scmp.ne.s32.totalorder %s100, %s101
    %p115 = scmp.eq.s32.totalorder %s16, 1
    %p116 = por %p114, %p115
    %p118 = scmp.ne.s32.totalorder %s101, %s117
    %p119 = scmp.eq.s32.totalorder %s16, 0
    %p120 = por %p118, %p119
    %s121 = ssub.s32 %s17, %s36
    %s122 = ssub.s32 %s18, %s32
    %s123 = sor.u32 %s121, %s122
    %p124 = scmp.eq.s32.totalorder %s123, 0
    %s126 = sadd.s32 %s125, 1
    %s127 = scalar_select %p124, %s125, %s126
    %p130 = pneg %p124
    %p131 = scmp.eq.s32.totalorder %s10, 1
    %p132 = por %p130, %p131
    %p133 = scmp.ne.s32.totalorder %s125, %s128
    %p134 = scmp.eq.s32.totalorder %s10, 0
    %p135 = por %p133, %p134
    %p136 = scmp.ne.s32.totalorder %s125, %s128
    %p137 = scmp.eq.s32.totalorder %s15, 1
    %p138 = por %p136, %p137
    %p139 = scmp.ne.s32.totalorder %s128, %s129
    %p140 = scmp.eq.s32.totalorder %s15, 0
    %p141 = por %p139, %p140
    %p142 = scmp.ne.s32.totalorder %s128, %s129
    %p143 = scmp.eq.s32.totalorder %s16, 1
    %p144 = por %p142, %p143
    %p146 = scmp.ne.s32.totalorder %s129, %s145
    %p147 = scmp.eq.s32.totalorder %s16, 0
    %p148 = por %p146, %p147
    %p149 = scmp.le.s32.totalorder 1, %s10
    %p150 = scmp.lt.s32.totalorder %s10, 3
    %p151 = pnand %p149, %p150
    %p152 = pneg %p151
    // Predicated region
    $region9: #{stem_forward.2} parent=5 // pred_check
      _
    $region10: #{stem_forward.2} parent=5 // pred_check_branch
      %154 = sbr.rel (%p151) target = $region12
    $region11: #{stem_forward.2} parent=5 // pred_region
      %s155 = ssub.s32 %s10, 1
      // Predicated region
      $region13: #{stem_forward.2} parent=11 // pred_check
        %p156 = pneg %p85
      $region14: #{stem_forward.2} parent=11 // pred_check_branch
        %158 = sbr.rel (%p156) target = $region16
      $region15: #{stem_forward.2} parent=11 // pred_region
        %s159 = smul.u32 32, %s22
        %p160 = scmp.lt.s32.totalorder %s159, 31
        %s161 = scalar_select %p160, %s159, 31
        %p162 = scmp.lt.s32.totalorder %s21, 0
        %s163 = scalar_select %p162, %s21, 0
        %s164 = sadd.s32 %s163, %s161
        %s165 = smul.addr %s164, 4
        %s166 = scalar_lea.vmem %s1, %s165
        %s167 = smul.u32 32, %s22
      $region16: #{stem_forward.2} parent=11 // pred_fallthru
        _
    $region12: #{stem_forward.2} parent=5 // pred_fallthru
      _
    %p168 = scmp.lt.s32.totalorder %s10, 2
    // Predicated region
    $region17: #{stem_forward.2} parent=5 // pred_check
      %p169 = pneg %p168
    $region18: #{stem_forward.2} parent=5 // pred_check_branch
      %171 = sbr.rel (%p169) target = $region20
    $region19: #{stem_forward.2} parent=5 // pred_region
      // Predicated region
      $region21: #{stem_forward.2} parent=19 // pred_check
        %p172 = pneg %p51
      $region22: #{stem_forward.2} parent=19 // pred_check_branch
        %174 = sbr.rel (%p172) target = $region24
      $region23: #{stem_forward.2} parent=19 // pred_region
        %s175 = smul.u32 32, %s17
        %s176 = smul.u32 2, %s19
        %p177 = scmp.lt.s32.totalorder %s175, 63
        %s178 = scalar_select %p177, %s175, 63
        %p179 = scmp.lt.s32.totalorder %s176, 1
        %s180 = scalar_select %p179, %s176, 1
        %s181 = smul.addr %s178, 2
        %s182 = sadd.s32 %s180, %s181
        %s183 = smul.addr %s182, 4
        %s184 = scalar_lea.vmem %s0, %s183
        %s185 = smul.u32 32, %s17
        %s186 = smul.u32 2, %s19
      $region24: #{stem_forward.2} parent=19 // pred_fallthru
        _
    $region20: #{stem_forward.2} parent=5 // pred_fallthru
      _
    %p187 = scmp.le.s32.totalorder 1, %s10
    %p188 = scmp.lt.s32.totalorder %s10, 3
    %p189 = pnand %p187, %p188
    %p190 = pneg %p189
    // Predicated region
    $region25: #{stem_forward.2} parent=5 // pred_check
      _
    $region26: #{stem_forward.2} parent=5 // pred_check_branch
      %192 = sbr.rel (%p189) target = $region28
    $region27: #{stem_forward.2} parent=5 // pred_region
      %s193 = ssub.s32 %s10, 1
      %s194 = smul.u32 32, %s20
      %s195 = smul.u32 2, %s22
      %p196 = scmp.lt.s32.totalorder %s194, 63
      %s197 = scalar_select %p196, %s194, 63
      %p198 = scmp.lt.s32.totalorder %s195, 1
      %s199 = scalar_select %p198, %s195, 1
      %s200 = smul.addr %s197, 2
      %s201 = sadd.s32 %s199, %s200
      %s202 = smul.addr %s201, 4
      %s203 = scalar_lea.vmem %s0, %s202
      %p204 = pneg %p57
      %p205 = pneg %p54
      %s206 = smul.u32 32, %s22
      %p207 = scmp.lt.s32.totalorder %s206, 31
      %s208 = scalar_select %p207, %s206, 31
      %p209 = scmp.lt.s32.totalorder %s21, 0
      %s210 = scalar_select %p209, %s21, 0
      %s211 = sadd.s32 %s210, %s208
      %s212 = smul.addr %s211, 4
      %s213 = scalar_lea.vmem %s1, %s212
      %p214 = pneg %p85
      %p215 = pneg %p82
      %p216 = pneg %p113
      %p217 = pneg %p110
      %s218 = smul.u32 32, %s20
      %p219 = scmp.lt.s32.totalorder %s218, 63
      %s220 = scalar_select %p219, %s218, 63
      %p221 = scmp.lt.s32.totalorder %s21, 0
      %s222 = scalar_select %p221, %s21, 0
      %s223 = sadd.s32 %s222, %s220
      %s224 = smul.addr %s223, 8
      %s225 = scalar_lea.vmem %s2, %s224
      %p226 = pneg %p141
      %p227 = pneg %p138
      %p228 = scmp.lt.s32.totalorder %s20, 1
      %s229 = scalar_select %p228, %s20, 1
      %p230 = scmp.lt.s32.totalorder %s21, 0
      %s231 = scalar_select %p230, %s21, 0
      %s232 = sadd.s32 %s231, %s229
      %s233 = smul.addr %s232, 8
      %s234 = scalar_lea.vmem %s3, %s233
      %s235 = smul.u32 32, %s20
      %s236 = smul.u32 2, %s22
      %p237 = scmp.lt.s32.totalorder %s235, 63
      %s238 = scalar_select %p237, %s235, 63
      %p239 = scmp.lt.s32.totalorder %s236, 1
      %s240 = scalar_select %p239, %s236, 1
      %s241 = smul.addr %s238, 2
      %s242 = sadd.s32 %s240, %s241
      %s243 = smul.addr %s242, 4
      %s244 = scalar_lea.vmem %s0, %s243
      %s245 = smul.u32 32, %s20
      %s246 = smul.u32 2, %s22
      %s247 = smul.u32 32, %s22
      %p248 = scmp.lt.s32.totalorder %s247, 31
      %s249 = scalar_select %p248, %s247, 31
      %p250 = scmp.lt.s32.totalorder %s21, 0
      %s251 = scalar_select %p250, %s21, 0
      %s252 = sadd.s32 %s251, %s249
      %s253 = smul.addr %s252, 4
      %s254 = scalar_lea.vmem %s1, %s253
      %s255 = smul.u32 32, %s22
      %s256 = smul.u32 32, %s20
      %p257 = scmp.lt.s32.totalorder %s256, 63
      %s258 = scalar_select %p257, %s256, 63
      %p259 = scmp.lt.s32.totalorder %s21, 0
      %s260 = scalar_select %p259, %s21, 0
      %s261 = sadd.s32 %s260, %s258
      %s262 = smul.addr %s261, 8
      %s263 = scalar_lea.vmem %s2, %s262
      %s264 = smul.u32 32, %s20
      %p265 = scmp.lt.s32.totalorder %s20, 1
      %s266 = scalar_select %p265, %s20, 1
      %p267 = scmp.lt.s32.totalorder %s21, 0
      %s268 = scalar_select %p267, %s21, 0
      %s269 = sadd.s32 %s268, %s266
      %s270 = smul.addr %s269, 8
      %s271 = scalar_lea.vmem %s3, %s270
      %p272 = scmp.eq.s32.totalorder %s22, 0
      // Predicated region
      $region29: #{stem_forward.2} parent=27 // pred_check
        %p273 = pneg %p272
      $region30: #{stem_forward.2} parent=27 // pred_check_branch
        %275 = sbr.rel (%p273) target = $region32
      $region31: #{stem_forward.2} parent=27 // pred_region
        %276 = vst [vmem:[#allocation2] sm:$0xff] 0.0
        %277 = vst [vmem:[#allocation2 + $0x8] sm:$0xff] 0.0
        %278 = vst [vmem:[#allocation2 + $0x10] sm:$0xff] 0.0
        %279 = vst [vmem:[#allocation2 + $0x18] sm:$0xff] 0.0
        %280 = vst [vmem:[#allocation2 + $0x20] sm:$0xff] 0.0
        %281 = vst [vmem:[#allocation2 + $0x28] sm:$0xff] 0.0
        %282 = vst [vmem:[#allocation2 + $0x30] sm:$0xff] 0.0
        %283 = vst [vmem:[#allocation2 + $0x38] sm:$0xff] 0.0
        %284 = vst [vmem:[#allocation2 + $0x40] sm:$0xff] 0.0
        %285 = vst [vmem:[#allocation2 + $0x48] sm:$0xff] 0.0
        %286 = vst [vmem:[#allocation2 + $0x50] sm:$0xff] 0.0
        %287 = vst [vmem:[#allocation2 + $0x58] sm:$0xff] 0.0
        %288 = vst [vmem:[#allocation2 + $0x60] sm:$0xff] 0.0
        %289 = vst [vmem:[#allocation2 + $0x68] sm:$0xff] 0.0
        %290 = vst [vmem:[#allocation2 + $0x70] sm:$0xff] 0.0
        %291 = vst [vmem:[#allocation2 + $0x78] sm:$0xff] 0.0
        %292 = vst [vmem:[#allocation2 + $0x80] sm:$0xff] 0.0
        %293 = vst [vmem:[#allocation2 + $0x88] sm:$0xff] 0.0
        %294 = vst [vmem:[#allocation2 + $0x90] sm:$0xff] 0.0
        %295 = vst [vmem:[#allocation2 + $0x98] sm:$0xff] 0.0
        %296 = vst [vmem:[#allocation2 + $0xa0] sm:$0xff] 0.0
        %297 = vst [vmem:[#allocation2 + $0xa8] sm:$0xff] 0.0
        %298 = vst [vmem:[#allocation2 + $0xb0] sm:$0xff] 0.0
        %299 = vst [vmem:[#allocation2 + $0xb8] sm:$0xff] 0.0
        %300 = vst [vmem:[#allocation2 + $0xc0] sm:$0xff] 0.0
        %301 = vst [vmem:[#allocation2 + $0xc8] sm:$0xff] 0.0
        %302 = vst [vmem:[#allocation2 + $0xd0] sm:$0xff] 0.0
        %303 = vst [vmem:[#allocation2 + $0xd8] sm:$0xff] 0.0
        %304 = vst [vmem:[#allocation2 + $0xe0] sm:$0xff] 0.0
        %305 = vst [vmem:[#allocation2 + $0xe8] sm:$0xff] 0.0
        %306 = vst [vmem:[#allocation2 + $0xf0] sm:$0xff] 0.0
        %307 = vst [vmem:[#allocation2 + $0xf8] sm:$0xff] 0.0
      $region32: #{stem_forward.2} parent=27 // pred_fallthru
        _
      %v308 = vld [vmem:[#allocation2] sm:$0xff]
      %v309 = vld [vmem:[#allocation2 + $0x8] sm:$0xff]
      %v310 = vld [vmem:[#allocation2 + $0x10] sm:$0xff]
      %v311 = vld [vmem:[#allocation2 + $0x18] sm:$0xff]
      %v312 = vld [vmem:[#allocation2 + $0x20] sm:$0xff]
      %v313 = vld [vmem:[#allocation2 + $0x28] sm:$0xff]
      %v314 = vld [vmem:[#allocation2 + $0x30] sm:$0xff]
      %v315 = vld [vmem:[#allocation2 + $0x38] sm:$0xff]
      %v316 = vld [vmem:[#allocation2 + $0x40] sm:$0xff]
      %v317 = vld [vmem:[#allocation2 + $0x48] sm:$0xff]
      %v318 = vld [vmem:[#allocation2 + $0x50] sm:$0xff]
      %v319 = vld [vmem:[#allocation2 + $0x58] sm:$0xff]
      %v320 = vld [vmem:[#allocation2 + $0x60] sm:$0xff]
      %v321 = vld [vmem:[#allocation2 + $0x68] sm:$0xff]
      %v322 = vld [vmem:[#allocation2 + $0x70] sm:$0xff]
      %v323 = vld [vmem:[#allocation2 + $0x78] sm:$0xff]
      %v324 = vld [vmem:[#allocation2 + $0x80] sm:$0xff]
      %v325 = vld [vmem:[#allocation2 + $0x88] sm:$0xff]
      %v326 = vld [vmem:[#allocation2 + $0x90] sm:$0xff]
      %v327 = vld [vmem:[#allocation2 + $0x98] sm:$0xff]
      %v328 = vld [vmem:[#allocation2 + $0xa0] sm:$0xff]
      %v329 = vld [vmem:[#allocation2 + $0xa8] sm:$0xff]
      %v330 = vld [vmem:[#allocation2 + $0xb0] sm:$0xff]
      %v331 = vld [vmem:[#allocation2 + $0xb8] sm:$0xff]
      %v332 = vld [vmem:[#allocation2 + $0xc0] sm:$0xff]
      %v333 = vld [vmem:[#allocation2 + $0xc8] sm:$0xff]
      %v334 = vld [vmem:[#allocation2 + $0xd0] sm:$0xff]
      %v335 = vld [vmem:[#allocation2 + $0xd8] sm:$0xff]
      %v336 = vld [vmem:[#allocation2 + $0xe0] sm:$0xff]
      %v337 = vld [vmem:[#allocation2 + $0xe8] sm:$0xff]
      %v338 = vld [vmem:[#allocation2 + $0xf0] sm:$0xff]
      %v339 = vld [vmem:[#allocation2 + $0xf8] sm:$0xff]
      %v340 = vld [vmem:[%s244] sm:$0xff]
      %v341 = vld [vmem:[%s244 + $0x8] sm:$0xff]
      %v342 = vld [vmem:[%s244 + $0x10] sm:$0xff]
      %v343 = vld [vmem:[%s244 + $0x18] sm:$0xff]
      %v344 = vld [vmem:[%s244 + $0x20] sm:$0xff]
      %v345 = vld [vmem:[%s244 + $0x28] sm:$0xff]
      %v346 = vld [vmem:[%s244 + $0x30] sm:$0xff]
      %v347 = vld [vmem:[%s244 + $0x38] sm:$0xff]
      %v348 = vld [vmem:[%s244 + $0x40] sm:$0xff]
      %v349 = vld [vmem:[%s244 + $0x48] sm:$0xff]
      %v350 = vld [vmem:[%s244 + $0x50] sm:$0xff]
      %v351 = vld [vmem:[%s244 + $0x58] sm:$0xff]
      %v352 = vld [vmem:[%s244 + $0x60] sm:$0xff]
      %v353 = vld [vmem:[%s244 + $0x68] sm:$0xff]
      %v354 = vld [vmem:[%s244 + $0x70] sm:$0xff]
      %v355 = vld [vmem:[%s244 + $0x78] sm:$0xff]
      %v356 = vld [vmem:[%s244 + $0x80] sm:$0xff]
      %v357 = vld [vmem:[%s244 + $0x88] sm:$0xff]
      %v358 = vld [vmem:[%s244 + $0x90] sm:$0xff]
      %v359 = vld [vmem:[%s244 + $0x98] sm:$0xff]
      %v360 = vld [vmem:[%s244 + $0xa0] sm:$0xff]
      %v361 = vld [vmem:[%s244 + $0xa8] sm:$0xff]
      %v362 = vld [vmem:[%s244 + $0xb0] sm:$0xff]
      %v363 = vld [vmem:[%s244 + $0xb8] sm:$0xff]
      %v364 = vld [vmem:[%s244 + $0xc0] sm:$0xff]
      %v365 = vld [vmem:[%s244 + $0xc8] sm:$0xff]
      %v366 = vld [vmem:[%s244 + $0xd0] sm:$0xff]
      %v367 = vld [vmem:[%s244 + $0xd8] sm:$0xff]
      %v368 = vld [vmem:[%s244 + $0xe0] sm:$0xff]
      %v369 = vld [vmem:[%s244 + $0xe8] sm:$0xff]
      %v370 = vld [vmem:[%s244 + $0xf0] sm:$0xff]
      %v371 = vld [vmem:[%s244 + $0xf8] sm:$0xff]
      %v372 = vld [vmem:[%s254] sm:$0xf]
      %v373 = vld [vmem:[%s254 + $0x4] sm:$0xf]
      %v374 = vld [vmem:[%s254 + $0x8] sm:$0xf]
      %v375 = vld [vmem:[%s254 + $0xc] sm:$0xf]
      %v376 = vld [vmem:[%s254 + $0x10] sm:$0xf]
      %v377 = vld [vmem:[%s254 + $0x14] sm:$0xf]
      %v378 = vld [vmem:[%s254 + $0x18] sm:$0xf]
      %v379 = vld [vmem:[%s254 + $0x1c] sm:$0xf]
      %v380 = vld [vmem:[%s254 + $0x20] sm:$0xf]
      %v381 = vld [vmem:[%s254 + $0x24] sm:$0xf]
      %v382 = vld [vmem:[%s254 + $0x28] sm:$0xf]
      %v383 = vld [vmem:[%s254 + $0x2c] sm:$0xf]
      %v384 = vld [vmem:[%s254 + $0x30] sm:$0xf]
      %v385 = vld [vmem:[%s254 + $0x34] sm:$0xf]
      %v386 = vld [vmem:[%s254 + $0x38] sm:$0xf]
      %v387 = vld [vmem:[%s254 + $0x3c] sm:$0xf]
      %v388 = vld [vmem:[%s254 + $0x40] sm:$0xf]
      %v389 = vld [vmem:[%s254 + $0x44] sm:$0xf]
      %v390 = vld [vmem:[%s254 + $0x48] sm:$0xf]
      %v391 = vld [vmem:[%s254 + $0x4c] sm:$0xf]
      %v392 = vld [vmem:[%s254 + $0x50] sm:$0xf]
      %v393 = vld [vmem:[%s254 + $0x54] sm:$0xf]
      %v394 = vld [vmem:[%s254 + $0x58] sm:$0xf]
      %v395 = vld [vmem:[%s254 + $0x5c] sm:$0xf]
      %v396 = vld [vmem:[%s254 + $0x60] sm:$0xf]
      %v397 = vld [vmem:[%s254 + $0x64] sm:$0xf]
      %v398 = vld [vmem:[%s254 + $0x68] sm:$0xf]
      %v399 = vld [vmem:[%s254 + $0x6c] sm:$0xf]
      %v400 = vld [vmem:[%s254 + $0x70] sm:$0xf]
      %v401 = vld [vmem:[%s254 + $0x74] sm:$0xf]
      %v402 = vld [vmem:[%s254 + $0x78] sm:$0xf]
      %v403 = vld [vmem:[%s254 + $0x7c] sm:$0xf]
      %v436 = vunpack.c.l.b16 %v340
      %v437 = vunpack.c.h.b16 %v340
      %v438 = vunpack.c.l.b16 %v341
      %v439 = vunpack.c.h.b16 %v341
      %v440 = vunpack.c.l.b16 %v342
      %v441 = vunpack.c.h.b16 %v342
      %v442 = vunpack.c.l.b16 %v343
      %v443 = vunpack.c.h.b16 %v343
      %v444 = vunpack.c.l.b16 %v344
      %v445 = vunpack.c.h.b16 %v344
      %v446 = vunpack.c.l.b16 %v345
      %v447 = vunpack.c.h.b16 %v345
      %v448 = vunpack.c.l.b16 %v346
      %v449 = vunpack.c.h.b16 %v346
      %v450 = vunpack.c.l.b16 %v347
      %v451 = vunpack.c.h.b16 %v347
      %v452 = vunpack.c.l.b16 %v348
      %v453 = vunpack.c.h.b16 %v348
      %v454 = vunpack.c.l.b16 %v349
      %v455 = vunpack.c.h.b16 %v349
      %v456 = vunpack.c.l.b16 %v350
      %v457 = vunpack.c.h.b16 %v350
      %v458 = vunpack.c.l.b16 %v351
      %v459 = vunpack.c.h.b16 %v351
      %v460 = vunpack.c.l.b16 %v352
      %v461 = vunpack.c.h.b16 %v352
      %v462 = vunpack.c.l.b16 %v353
      %v463 = vunpack.c.h.b16 %v353
      %v464 = vunpack.c.l.b16 %v354
      %v465 = vunpack.c.h.b16 %v354
      %v466 = vunpack.c.l.b16 %v355
      %v467 = vunpack.c.h.b16 %v355
      %v468 = vunpack.c.l.b16 %v356
      %v469 = vunpack.c.h.b16 %v356
      %v470 = vunpack.c.l.b16 %v357
      %v471 = vunpack.c.h.b16 %v357
      %v472 = vunpack.c.l.b16 %v358
      %v473 = vunpack.c.h.b16 %v358
      %v474 = vunpack.c.l.b16 %v359
      %v475 = vunpack.c.h.b16 %v359
      %v476 = vunpack.c.l.b16 %v360
      %v477 = vunpack.c.h.b16 %v360
      %v478 = vunpack.c.l.b16 %v361
      %v479 = vunpack.c.h.b16 %v361
      %v480 = vunpack.c.l.b16 %v362
      %v481 = vunpack.c.h.b16 %v362
      %v482 = vunpack.c.l.b16 %v363
      %v483 = vunpack.c.h.b16 %v363
      %v484 = vunpack.c.l.b16 %v364
      %v485 = vunpack.c.h.b16 %v364
      %v486 = vunpack.c.l.b16 %v365
      %v487 = vunpack.c.h.b16 %v365
      %v488 = vunpack.c.l.b16 %v366
      %v489 = vunpack.c.h.b16 %v366
      %v490 = vunpack.c.l.b16 %v367
      %v491 = vunpack.c.h.b16 %v367
      %v492 = vunpack.c.l.b16 %v368
      %v493 = vunpack.c.h.b16 %v368
      %v494 = vunpack.c.l.b16 %v369
      %v495 = vunpack.c.h.b16 %v369
      %v496 = vunpack.c.l.b16 %v370
      %v497 = vunpack.c.h.b16 %v370
      %v498 = vunpack.c.l.b16 %v371
      %v499 = vunpack.c.h.b16 %v371
      %v500 = vpack.c.b16 %v438, %v436
      %v501 = vpack.c.b16 %v439, %v437
      %v502 = vpack.c.b16 %v442, %v440
      %v503 = vpack.c.b16 %v443, %v441
      %v504 = vpack.c.b16 %v446, %v444
      %v505 = vpack.c.b16 %v447, %v445
      %v506 = vpack.c.b16 %v450, %v448
      %v507 = vpack.c.b16 %v451, %v449
      %v508 = vpack.c.b16 %v454, %v452
      %v509 = vpack.c.b16 %v455, %v453
      %v510 = vpack.c.b16 %v458, %v456
      %v511 = vpack.c.b16 %v459, %v457
      %v512 = vpack.c.b16 %v462, %v460
      %v513 = vpack.c.b16 %v463, %v461
      %v514 = vpack.c.b16 %v466, %v464
      %v515 = vpack.c.b16 %v467, %v465
      %v516 = vpack.c.b16 %v470, %v468
      %v517 = vpack.c.b16 %v471, %v469
      %v518 = vpack.c.b16 %v474, %v472
      %v519 = vpack.c.b16 %v475, %v473
      %v520 = vpack.c.b16 %v478, %v476
      %v521 = vpack.c.b16 %v479, %v477
      %v522 = vpack.c.b16 %v482, %v480
      %v523 = vpack.c.b16 %v483, %v481
      %v524 = vpack.c.b16 %v486, %v484
      %v525 = vpack.c.b16 %v487, %v485
      %v526 = vpack.c.b16 %v490, %v488
      %v527 = vpack.c.b16 %v491, %v489
      %v528 = vpack.c.b16 %v494, %v492
      %v529 = vpack.c.b16 %v495, %v493
      %v530 = vpack.c.b16 %v498, %v496
      %v531 = vpack.c.b16 %v499, %v497
      %v596 = vunpack.c.l.b16 %v372
      %v597 = vunpack.c.l.b16 %v373
      %v598 = vunpack.c.l.b16 %v374
      %v599 = vunpack.c.l.b16 %v375
      %v600 = vunpack.c.l.b16 %v376
      %v601 = vunpack.c.l.b16 %v377
      %v602 = vunpack.c.l.b16 %v378
      %v603 = vunpack.c.l.b16 %v379
      %v604 = vunpack.c.l.b16 %v380
      %v605 = vunpack.c.l.b16 %v381
      %v606 = vunpack.c.l.b16 %v382
      %v607 = vunpack.c.l.b16 %v383
      %v608 = vunpack.c.l.b16 %v384
      %v609 = vunpack.c.l.b16 %v385
      %v610 = vunpack.c.l.b16 %v386
      %v611 = vunpack.c.l.b16 %v387
      %v612 = vunpack.c.l.b16 %v388
      %v613 = vunpack.c.l.b16 %v389
      %v614 = vunpack.c.l.b16 %v390
      %v615 = vunpack.c.l.b16 %v391
      %v616 = vunpack.c.l.b16 %v392
      %v617 = vunpack.c.l.b16 %v393
      %v618 = vunpack.c.l.b16 %v394
      %v619 = vunpack.c.l.b16 %v395
      %v620 = vunpack.c.l.b16 %v396
      %v621 = vunpack.c.l.b16 %v397
      %v622 = vunpack.c.l.b16 %v398
      %v623 = vunpack.c.l.b16 %v399
      %v624 = vunpack.c.l.b16 %v400
      %v625 = vunpack.c.l.b16 %v401
      %v626 = vunpack.c.l.b16 %v402
      %v627 = vunpack.c.l.b16 %v403
      %v628 = vpack.c.b16 %v597, %v596
      %v629 = vpack.c.b16 %v599, %v598
      %v630 = vpack.c.b16 %v601, %v600
      %v631 = vpack.c.b16 %v603, %v602
      %v632 = vpack.c.b16 %v605, %v604
      %v633 = vpack.c.b16 %v607, %v606
      %v634 = vpack.c.b16 %v609, %v608
      %v635 = vpack.c.b16 %v611, %v610
      %v636 = vpack.c.b16 %v613, %v612
      %v637 = vpack.c.b16 %v615, %v614
      %v638 = vpack.c.b16 %v617, %v616
      %v639 = vpack.c.b16 %v619, %v618
      %v640 = vpack.c.b16 %v621, %v620
      %v641 = vpack.c.b16 %v623, %v622
      %v642 = vpack.c.b16 %v625, %v624
      %v643 = vpack.c.b16 %v627, %v626
      %660 = vmatpush.bf16.msra.mxu0 %v635
      %661 = vmatpush.bf16.msra.mxu0 %v634
      %662 = vmatpush.bf16.msra.mxu0 %v633
      %663 = vmatpush.bf16.msra.mxu0 %v632
      %664 = vmatpush.bf16.msra.mxu0 %v631
      %665 = vmatpush.bf16.msra.mxu0 %v630
      %666 = vmatpush.bf16.msra.mxu0 %v629
      %667 = vmatpush.bf16.msra.mxu0 %v628
      %668 = vmatmul.bf16.gmra.mxu0 %v500
      %v669 = vpop.f32.mrf.mxu0
      %v670 = vadd.f32 0.0, %v669
      %v671 = vpop.f32.mrf.mxu0
      %v672 = vadd.f32 0.0, %v671
      %673 = vmatmul.bf16.gmra.mxu0 %v502
      %v674 = vpop.f32.mrf.mxu0
      %v675 = vadd.f32 0.0, %v674
      %v676 = vpop.f32.mrf.mxu0
      %v677 = vadd.f32 0.0, %v676
      %678 = vmatmul.bf16.gmra.mxu0 %v504
      %v679 = vpop.f32.mrf.mxu0
      %v680 = vadd.f32 0.0, %v679
      %v681 = vpop.f32.mrf.mxu0
      %v682 = vadd.f32 0.0, %v681
      %683 = vmatmul.bf16.gmra.mxu0 %v506
      %v684 = vpop.f32.mrf.mxu0
      %v685 = vadd.f32 0.0, %v684
      %v686 = vpop.f32.mrf.mxu0
      %v687 = vadd.f32 0.0, %v686
      %688 = vmatmul.bf16.gmra.mxu0 %v508
      %v689 = vpop.f32.mrf.mxu0
      %v690 = vadd.f32 0.0, %v689
      %v691 = vpop.f32.mrf.mxu0
      %v692 = vadd.f32 0.0, %v691
      %693 = vmatmul.bf16.gmra.mxu0 %v510
      %v694 = vpop.f32.mrf.mxu0
      %v695 = vadd.f32 0.0, %v694
      %v696 = vpop.f32.mrf.mxu0
      %v697 = vadd.f32 0.0, %v696
      %698 = vmatmul.bf16.gmra.mxu0 %v512
      %v699 = vpop.f32.mrf.mxu0
      %v700 = vadd.f32 0.0, %v699
      %v701 = vpop.f32.mrf.mxu0
      %v702 = vadd.f32 0.0, %v701
      %703 = vmatmul.bf16.gmra.mxu0 %v514
      %v704 = vpop.f32.mrf.mxu0
      %v705 = vadd.f32 0.0, %v704
      %v706 = vpop.f32.mrf.mxu0
      %v707 = vadd.f32 0.0, %v706
      %708 = vmatmul.bf16.gmra.mxu0 %v516
      %v709 = vpop.f32.mrf.mxu0
      %v710 = vadd.f32 0.0, %v709
      %v711 = vpop.f32.mrf.mxu0
      %v712 = vadd.f32 0.0, %v711
      %713 = vmatmul.bf16.gmra.mxu0 %v518
      %v714 = vpop.f32.mrf.mxu0
      %v715 = vadd.f32 0.0, %v714
      %v716 = vpop.f32.mrf.mxu0
      %v717 = vadd.f32 0.0, %v716
      %718 = vmatmul.bf16.gmra.mxu0 %v520
      %v719 = vpop.f32.mrf.mxu0
      %v720 = vadd.f32 0.0, %v719
      %v721 = vpop.f32.mrf.mxu0
      %v722 = vadd.f32 0.0, %v721
      %723 = vmatmul.bf16.gmra.mxu0 %v522
      %v724 = vpop.f32.mrf.mxu0
      %v725 = vadd.f32 0.0, %v724
      %v726 = vpop.f32.mrf.mxu0
      %v727 = vadd.f32 0.0, %v726
      %728 = vmatmul.bf16.gmra.mxu0 %v524
      %v729 = vpop.f32.mrf.mxu0
      %v730 = vadd.f32 0.0, %v729
      %v731 = vpop.f32.mrf.mxu0
      %v732 = vadd.f32 0.0, %v731
      %733 = vmatmul.bf16.gmra.mxu0 %v526
      %v734 = vpop.f32.mrf.mxu0
      %v735 = vadd.f32 0.0, %v734
      %v736 = vpop.f32.mrf.mxu0
      %v737 = vadd.f32 0.0, %v736
      %738 = vmatmul.bf16.gmra.mxu0 %v528
      %v739 = vpop.f32.mrf.mxu0
      %v740 = vadd.f32 0.0, %v739
      %v741 = vpop.f32.mrf.mxu0
      %v742 = vadd.f32 0.0, %v741
      %743 = vmatmul.bf16.gmra.mxu0 %v530
      %v744 = vpop.f32.mrf.mxu0
      %v745 = vadd.f32 0.0, %v744
      %v746 = vpop.f32.mrf.mxu0
      %v747 = vadd.f32 0.0, %v746
      %748 = vdwg.mxu0
      %749 = vmatpush.bf16.msra.mxu0 %v643
      %750 = vmatpush.bf16.msra.mxu0 %v642
      %751 = vmatpush.bf16.msra.mxu0 %v641
      %752 = vmatpush.bf16.msra.mxu0 %v640
      %753 = vmatpush.bf16.msra.mxu0 %v639
      %754 = vmatpush.bf16.msra.mxu0 %v638
      %755 = vmatpush.bf16.msra.mxu0 %v637
      %756 = vmatpush.bf16.msra.mxu0 %v636
      %757 = vmatmul.bf16.gmra.mxu0 %v501
      %v758 = vpop.f32.mrf.mxu0
      %v759 = vadd.f32 %v670, %v758
      %v760 = vpop.f32.mrf.mxu0
      %v761 = vadd.f32 %v672, %v760
      %762 = vmatmul.bf16.gmra.mxu0 %v503
      %v763 = vpop.f32.mrf.mxu0
      %v764 = vadd.f32 %v675, %v763
      %v765 = vpop.f32.mrf.mxu0
      %v766 = vadd.f32 %v677, %v765
      %767 = vmatmul.bf16.gmra.mxu0 %v505
      %v768 = vpop.f32.mrf.mxu0
      %v769 = vadd.f32 %v680, %v768
      %v770 = vpop.f32.mrf.mxu0
      %v771 = vadd.f32 %v682, %v770
      %772 = vmatmul.bf16.gmra.mxu0 %v507
      %v773 = vpop.f32.mrf.mxu0
      %v774 = vadd.f32 %v685, %v773
      %v775 = vpop.f32.mrf.mxu0
      %v776 = vadd.f32 %v687, %v775
      %777 = vmatmul.bf16.gmra.mxu0 %v509
      %v778 = vpop.f32.mrf.mxu0
      %v779 = vadd.f32 %v690, %v778
      %v780 = vpop.f32.mrf.mxu0
      %v781 = vadd.f32 %v692, %v780
      %782 = vmatmul.bf16.gmra.mxu0 %v511
      %v783 = vpop.f32.mrf.mxu0
      %v784 = vadd.f32 %v695, %v783
      %v785 = vpop.f32.mrf.mxu0
      %v786 = vadd.f32 %v697, %v785
      %787 = vmatmul.bf16.gmra.mxu0 %v513
      %v788 = vpop.f32.mrf.mxu0
      %v789 = vadd.f32 %v700, %v788
      %v790 = vpop.f32.mrf.mxu0
      %v791 = vadd.f32 %v702, %v790
      %792 = vmatmul.bf16.gmra.mxu0 %v515
      %v793 = vpop.f32.mrf.mxu0
      %v794 = vadd.f32 %v705, %v793
      %v795 = vpop.f32.mrf.mxu0
      %v796 = vadd.f32 %v707, %v795
      %797 = vmatmul.bf16.gmra.mxu0 %v517
      %v798 = vpop.f32.mrf.mxu0
      %v799 = vadd.f32 %v710, %v798
      %v800 = vpop.f32.mrf.mxu0
      %v801 = vadd.f32 %v712, %v800
      %802 = vmatmul.bf16.gmra.mxu0 %v519
      %v803 = vpop.f32.mrf.mxu0
      %v804 = vadd.f32 %v715, %v803
      %v805 = vpop.f32.mrf.mxu0
      %v806 = vadd.f32 %v717, %v805
      %807 = vmatmul.bf16.gmra.mxu0 %v521
      %v808 = vpop.f32.mrf.mxu0
      %v809 = vadd.f32 %v720, %v808
      %v810 = vpop.f32.mrf.mxu0
      %v811 = vadd.f32 %v722, %v810
      %812 = vmatmul.bf16.gmra.mxu0 %v523
      %v813 = vpop.f32.mrf.mxu0
      %v814 = vadd.f32 %v725, %v813
      %v815 = vpop.f32.mrf.mxu0
      %v816 = vadd.f32 %v727, %v815
      %817 = vmatmul.bf16.gmra.mxu0 %v525
      %v818 = vpop.f32.mrf.mxu0
      %v819 = vadd.f32 %v730, %v818
      %v820 = vpop.f32.mrf.mxu0
      %v821 = vadd.f32 %v732, %v820
      %822 = vmatmul.bf16.gmra.mxu0 %v527
      %v823 = vpop.f32.mrf.mxu0
      %v824 = vadd.f32 %v735, %v823
      %v825 = vpop.f32.mrf.mxu0
      %v826 = vadd.f32 %v737, %v825
      %827 = vmatmul.bf16.gmra.mxu0 %v529
      %v828 = vpop.f32.mrf.mxu0
      %v829 = vadd.f32 %v740, %v828
      %v830 = vpop.f32.mrf.mxu0
      %v831 = vadd.f32 %v742, %v830
      %832 = vmatmul.bf16.gmra.mxu0 %v531
      %v833 = vpop.f32.mrf.mxu0
      %v834 = vadd.f32 %v745, %v833
      %v835 = vpop.f32.mrf.mxu0
      %v836 = vadd.f32 %v747, %v835
      %837 = vdwg.mxu0
      %v838 = vadd.f32 %v308, %v759
      %v839 = vadd.f32 %v309, %v761
      %v840 = vadd.f32 %v310, %v764
      %v841 = vadd.f32 %v311, %v766
      %v842 = vadd.f32 %v312, %v769
      %v843 = vadd.f32 %v313, %v771
      %v844 = vadd.f32 %v314, %v774
      %v845 = vadd.f32 %v315, %v776
      %v846 = vadd.f32 %v316, %v779
      %v847 = vadd.f32 %v317, %v781
      %v848 = vadd.f32 %v318, %v784
      %v849 = vadd.f32 %v319, %v786
      %v850 = vadd.f32 %v320, %v789
      %v851 = vadd.f32 %v321, %v791
      %v852 = vadd.f32 %v322, %v794
      %v853 = vadd.f32 %v323, %v796
      %v854 = vadd.f32 %v324, %v799
      %v855 = vadd.f32 %v325, %v801
      %v856 = vadd.f32 %v326, %v804
      %v857 = vadd.f32 %v327, %v806
      %v858 = vadd.f32 %v328, %v809
      %v859 = vadd.f32 %v329, %v811
      %v860 = vadd.f32 %v330, %v814
      %v861 = vadd.f32 %v331, %v816
      %v862 = vadd.f32 %v332, %v819
      %v863 = vadd.f32 %v333, %v821
      %v864 = vadd.f32 %v334, %v824
      %v865 = vadd.f32 %v335, %v826
      %v866 = vadd.f32 %v336, %v829
      %v867 = vadd.f32 %v337, %v831
      %v868 = vadd.f32 %v338, %v834
      %v869 = vadd.f32 %v339, %v836
      %870 = vst [vmem:[#allocation2] sm:$0xff] %v838
      %871 = vst [vmem:[#allocation2 + $0x8] sm:$0xff] %v839
      %872 = vst [vmem:[#allocation2 + $0x10] sm:$0xff] %v840
      %873 = vst [vmem:[#allocation2 + $0x18] sm:$0xff] %v841
      %874 = vst [vmem:[#allocation2 + $0x20] sm:$0xff] %v842
      %875 = vst [vmem:[#allocation2 + $0x28] sm:$0xff] %v843
      %876 = vst [vmem:[#allocation2 + $0x30] sm:$0xff] %v844
      %877 = vst [vmem:[#allocation2 + $0x38] sm:$0xff] %v845
      %878 = vst [vmem:[#allocation2 + $0x40] sm:$0xff] %v846
      %879 = vst [vmem:[#allocation2 + $0x48] sm:$0xff] %v847
      %880 = vst [vmem:[#allocation2 + $0x50] sm:$0xff] %v848
      %881 = vst [vmem:[#allocation2 + $0x58] sm:$0xff] %v849
      %882 = vst [vmem:[#allocation2 + $0x60] sm:$0xff] %v850
      %883 = vst [vmem:[#allocation2 + $0x68] sm:$0xff] %v851
      %884 = vst [vmem:[#allocation2 + $0x70] sm:$0xff] %v852
      %885 = vst [vmem:[#allocation2 + $0x78] sm:$0xff] %v853
      %886 = vst [vmem:[#allocation2 + $0x80] sm:$0xff] %v854
      %887 = vst [vmem:[#allocation2 + $0x88] sm:$0xff] %v855
      %888 = vst [vmem:[#allocation2 + $0x90] sm:$0xff] %v856
      %889 = vst [vmem:[#allocation2 + $0x98] sm:$0xff] %v857
      %890 = vst [vmem:[#allocation2 + $0xa0] sm:$0xff] %v858
      %891 = vst [vmem:[#allocation2 + $0xa8] sm:$0xff] %v859
      %892 = vst [vmem:[#allocation2 + $0xb0] sm:$0xff] %v860
      %893 = vst [vmem:[#allocation2 + $0xb8] sm:$0xff] %v861
      %894 = vst [vmem:[#allocation2 + $0xc0] sm:$0xff] %v862
      %895 = vst [vmem:[#allocation2 + $0xc8] sm:$0xff] %v863
      %896 = vst [vmem:[#allocation2 + $0xd0] sm:$0xff] %v864
      %897 = vst [vmem:[#allocation2 + $0xd8] sm:$0xff] %v865
      %898 = vst [vmem:[#allocation2 + $0xe0] sm:$0xff] %v866
      %899 = vst [vmem:[#allocation2 + $0xe8] sm:$0xff] %v867
      %900 = vst [vmem:[#allocation2 + $0xf0] sm:$0xff] %v868
      %901 = vst [vmem:[#allocation2 + $0xf8] sm:$0xff] %v869
      // Predicated region
      $region33: #{stem_forward.2} parent=27 // pred_check
        %p902 = pneg %p272
      $region34: #{stem_forward.2} parent=27 // pred_check_branch
        %904 = sbr.rel (%p902) target = $region36
      $region35: #{stem_forward.2} parent=27 // pred_region
        %v905 = vld [vmem:[#allocation2] sm:$0xff]
        %v906 = vld [vmem:[#allocation2 + $0x8] sm:$0xff]
        %v907 = vld [vmem:[#allocation2 + $0x10] sm:$0xff]
        %v908 = vld [vmem:[#allocation2 + $0x18] sm:$0xff]
        %v909 = vld [vmem:[#allocation2 + $0x20] sm:$0xff]
        %v910 = vld [vmem:[#allocation2 + $0x28] sm:$0xff]
        %v911 = vld [vmem:[#allocation2 + $0x30] sm:$0xff]
        %v912 = vld [vmem:[#allocation2 + $0x38] sm:$0xff]
        %v913 = vld [vmem:[#allocation2 + $0x40] sm:$0xff]
        %v914 = vld [vmem:[#allocation2 + $0x48] sm:$0xff]
        %v915 = vld [vmem:[#allocation2 + $0x50] sm:$0xff]
        %v916 = vld [vmem:[#allocation2 + $0x58] sm:$0xff]
        %v917 = vld [vmem:[#allocation2 + $0x60] sm:$0xff]
        %v918 = vld [vmem:[#allocation2 + $0x68] sm:$0xff]
        %v919 = vld [vmem:[#allocation2 + $0x70] sm:$0xff]
        %v920 = vld [vmem:[#allocation2 + $0x78] sm:$0xff]
        %v921 = vld [vmem:[#allocation2 + $0x80] sm:$0xff]
        %v922 = vld [vmem:[#allocation2 + $0x88] sm:$0xff]
        %v923 = vld [vmem:[#allocation2 + $0x90] sm:$0xff]
        %v924 = vld [vmem:[#allocation2 + $0x98] sm:$0xff]
        %v925 = vld [vmem:[#allocation2 + $0xa0] sm:$0xff]
        %v926 = vld [vmem:[#allocation2 + $0xa8] sm:$0xff]
        %v927 = vld [vmem:[#allocation2 + $0xb0] sm:$0xff]
        %v928 = vld [vmem:[#allocation2 + $0xb8] sm:$0xff]
        %v929 = vld [vmem:[#allocation2 + $0xc0] sm:$0xff]
        %v930 = vld [vmem:[#allocation2 + $0xc8] sm:$0xff]
        %v931 = vld [vmem:[#allocation2 + $0xd0] sm:$0xff]
        %v932 = vld [vmem:[#allocation2 + $0xd8] sm:$0xff]
        %v933 = vld [vmem:[#allocation2 + $0xe0] sm:$0xff]
        %v934 = vld [vmem:[#allocation2 + $0xe8] sm:$0xff]
        %v935 = vld [vmem:[#allocation2 + $0xf0] sm:$0xff]
        %v936 = vld [vmem:[#allocation2 + $0xf8] sm:$0xff]
        %937 = vst [vmem:[%s263] sm:$0xff] %v905
        %938 = vst [vmem:[%s263 + $0x8] sm:$0xff] %v906
        %939 = vst [vmem:[%s263 + $0x10] sm:$0xff] %v907
        %940 = vst [vmem:[%s263 + $0x18] sm:$0xff] %v908
        %941 = vst [vmem:[%s263 + $0x20] sm:$0xff] %v909
        %942 = vst [vmem:[%s263 + $0x28] sm:$0xff] %v910
        %943 = vst [vmem:[%s263 + $0x30] sm:$0xff] %v911
        %944 = vst [vmem:[%s263 + $0x38] sm:$0xff] %v912
        %945 = vst [vmem:[%s263 + $0x40] sm:$0xff] %v913
        %946 = vst [vmem:[%s263 + $0x48] sm:$0xff] %v914
        %947 = vst [vmem:[%s263 + $0x50] sm:$0xff] %v915
        %948 = vst [vmem:[%s263 + $0x58] sm:$0xff] %v916
        %949 = vst [vmem:[%s263 + $0x60] sm:$0xff] %v917
        %950 = vst [vmem:[%s263 + $0x68] sm:$0xff] %v918
        %951 = vst [vmem:[%s263 + $0x70] sm:$0xff] %v919
        %952 = vst [vmem:[%s263 + $0x78] sm:$0xff] %v920
        %953 = vst [vmem:[%s263 + $0x80] sm:$0xff] %v921
        %954 = vst [vmem:[%s263 + $0x88] sm:$0xff] %v922
        %955 = vst [vmem:[%s263 + $0x90] sm:$0xff] %v923
        %956 = vst [vmem:[%s263 + $0x98] sm:$0xff] %v924
        %957 = vst [vmem:[%s263 + $0xa0] sm:$0xff] %v925
        %958 = vst [vmem:[%s263 + $0xa8] sm:$0xff] %v926
        %959 = vst [vmem:[%s263 + $0xb0] sm:$0xff] %v927
        %960 = vst [vmem:[%s263 + $0xb8] sm:$0xff] %v928
        %961 = vst [vmem:[%s263 + $0xc0] sm:$0xff] %v929
        %962 = vst [vmem:[%s263 + $0xc8] sm:$0xff] %v930
        %963 = vst [vmem:[%s263 + $0xd0] sm:$0xff] %v931
        %964 = vst [vmem:[%s263 + $0xd8] sm:$0xff] %v932
        %965 = vst [vmem:[%s263 + $0xe0] sm:$0xff] %v933
        %966 = vst [vmem:[%s263 + $0xe8] sm:$0xff] %v934
        %967 = vst [vmem:[%s263 + $0xf0] sm:$0xff] %v935
        %968 = vst [vmem:[%s263 + $0xf8] sm:$0xff] %v936
        %v969 = vadd.f32 %v905, %v906
        %v970 = vadd.f32 %v969, %v907
        %v971 = vadd.f32 %v970, %v908
        %v972 = vadd.f32 %v971, %v909
        %v973 = vadd.f32 %v972, %v910
        %v974 = vadd.f32 %v973, %v911
        %v975 = vadd.f32 %v974, %v912
        %v976 = vadd.f32 %v975, %v913
        %v977 = vadd.f32 %v976, %v914
        %v978 = vadd.f32 %v977, %v915
        %v979 = vadd.f32 %v978, %v916
        %v980 = vadd.f32 %v979, %v917
        %v981 = vadd.f32 %v980, %v918
        %v982 = vadd.f32 %v981, %v919
        %v983 = vadd.f32 %v982, %v920
        %v984 = vadd.f32 %v983, %v921
        %v985 = vadd.f32 %v984, %v922
        %v986 = vadd.f32 %v985, %v923
        %v987 = vadd.f32 %v986, %v924
        %v988 = vadd.f32 %v987, %v925
        %v989 = vadd.f32 %v988, %v926
        %v990 = vadd.f32 %v989, %v927
        %v991 = vadd.f32 %v990, %v928
        %v992 = vadd.f32 %v991, %v929
        %v993 = vadd.f32 %v992, %v930
        %v994 = vadd.f32 %v993, %v931
        %v995 = vadd.f32 %v994, %v932
        %v996 = vadd.f32 %v995, %v933
        %v997 = vadd.f32 %v996, %v934
        %v998 = vadd.f32 %v997, %v935
        %v999 = vadd.f32 %v998, %v936
        %v1000 = vrot.slane %v999, 4
        %v1001 = vadd.f32 %v999, %v1000
        %v1002 = vrot.slane %v1001, 2
        %v1003 = vadd.f32 %v1001, %v1002
        %v1004 = vrot.slane %v1003, 1
        %v1005 = vadd.f32 %v1003, %v1004
        %v1006 = vmul.f32 %v905, %v905
        %v1007 = vmul.f32 %v906, %v906
        %v1008 = vmul.f32 %v907, %v907
        %v1009 = vmul.f32 %v908, %v908
        %v1010 = vmul.f32 %v909, %v909
        %v1011 = vmul.f32 %v910, %v910
        %v1012 = vmul.f32 %v911, %v911
        %v1013 = vmul.f32 %v912, %v912
        %v1014 = vmul.f32 %v913, %v913
        %v1015 = vmul.f32 %v914, %v914
        %v1016 = vmul.f32 %v915, %v915
        %v1017 = vmul.f32 %v916, %v916
        %v1018 = vmul.f32 %v917, %v917
        %v1019 = vmul.f32 %v918, %v918
        %v1020 = vmul.f32 %v919, %v919
        %v1021 = vmul.f32 %v920, %v920
        %v1022 = vmul.f32 %v921, %v921
        %v1023 = vmul.f32 %v922, %v922
        %v1024 = vmul.f32 %v923, %v923
        %v1025 = vmul.f32 %v924, %v924
        %v1026 = vmul.f32 %v925, %v925
        %v1027 = vmul.f32 %v926, %v926
        %v1028 = vmul.f32 %v927, %v927
        %v1029 = vmul.f32 %v928, %v928
        %v1030 = vmul.f32 %v929, %v929
        %v1031 = vmul.f32 %v930, %v930
        %v1032 = vmul.f32 %v931, %v931
        %v1033 = vmul.f32 %v932, %v932
        %v1034 = vmul.f32 %v933, %v933
        %v1035 = vmul.f32 %v934, %v934
        %v1036 = vmul.f32 %v935, %v935
        %v1037 = vmul.f32 %v936, %v936
        %v1038 = vadd.f32 %v1006, %v1007
        %v1039 = vadd.f32 %v1038, %v1008
        %v1040 = vadd.f32 %v1039, %v1009
        %v1041 = vadd.f32 %v1040, %v1010
        %v1042 = vadd.f32 %v1041, %v1011
        %v1043 = vadd.f32 %v1042, %v1012
        %v1044 = vadd.f32 %v1043, %v1013
        %v1045 = vadd.f32 %v1044, %v1014
        %v1046 = vadd.f32 %v1045, %v1015
        %v1047 = vadd.f32 %v1046, %v1016
        %v1048 = vadd.f32 %v1047, %v1017
        %v1049 = vadd.f32 %v1048, %v1018
        %v1050 = vadd.f32 %v1049, %v1019
        %v1051 = vadd.f32 %v1050, %v1020
        %v1052 = vadd.f32 %v1051, %v1021
        %v1053 = vadd.f32 %v1052, %v1022
        %v1054 = vadd.f32 %v1053, %v1023
        %v1055 = vadd.f32 %v1054, %v1024
        %v1056 = vadd.f32 %v1055, %v1025
        %v1057 = vadd.f32 %v1056, %v1026
        %v1058 = vadd.f32 %v1057, %v1027
        %v1059 = vadd.f32 %v1058, %v1028
        %v1060 = vadd.f32 %v1059, %v1029
        %v1061 = vadd.f32 %v1060, %v1030
        %v1062 = vadd.f32 %v1061, %v1031
        %v1063 = vadd.f32 %v1062, %v1032
        %v1064 = vadd.f32 %v1063, %v1033
        %v1065 = vadd.f32 %v1064, %v1034
        %v1066 = vadd.f32 %v1065, %v1035
        %v1067 = vadd.f32 %v1066, %v1036
        %v1068 = vadd.f32 %v1067, %v1037
        %v1069 = vrot.slane %v1068, 4
        %v1070 = vadd.f32 %v1068, %v1069
        %v1071 = vrot.slane %v1070, 2
        %v1072 = vadd.f32 %v1070, %v1071
        %v1073 = vrot.slane %v1072, 1
        %v1074 = vadd.f32 %v1072, %v1073
        %vm1075 = vcmask 1040384
        %v1076 = vsel %vm1075, %v1005, %v1074
        %vm1077 = vcmask 1041408
        %v1078 = vsel %vm1077, %v1076, 0.0
        %1079 = vst [vmem:[%s271] sm:$0xff] %v1078
      $region36: #{stem_forward.2} parent=27 // pred_fallthru
        _
      %s1080 = smul.u32 32, %s20
      %p1081 = scmp.lt.s32.totalorder %s1080, 63
      %s1082 = scalar_select %p1081, %s1080, 63
      %p1083 = scmp.lt.s32.totalorder %s21, 0
      %s1084 = scalar_select %p1083, %s21, 0
      %s1085 = sadd.s32 %s1084, %s1082
      %s1086 = smul.addr %s1085, 8
      %s1087 = scalar_lea.vmem %s2, %s1086
      %p1088 = scmp.lt.s32.totalorder %s20, 1
      %s1089 = scalar_select %p1088, %s20, 1
      %p1090 = scmp.lt.s32.totalorder %s21, 0
      %s1091 = scalar_select %p1090, %s21, 0
      %s1092 = sadd.s32 %s1091, %s1089
      %s1093 = smul.addr %s1092, 8
      %s1094 = scalar_lea.vmem %s3, %s1093
      // Predicated region
      $region37: #{stem_forward.2} parent=27 // pred_check
        %p1095 = pneg %p110
      $region38: #{stem_forward.2} parent=27 // pred_check_branch
        %1097 = sbr.rel (%p1095) target = $region40
      $region39: #{stem_forward.2} parent=27 // pred_region
        %s1098 = smul.u32 32, %s20
      $region40: #{stem_forward.2} parent=27 // pred_fallthru
        _
      // Predicated region
      $region41: #{stem_forward.2} parent=27 // pred_check
        %p1099 = pneg %p138
      $region42: #{stem_forward.2} parent=27 // pred_check_branch
        %1101 = sbr.rel (%p1099) target = $region44
      $region43: #{stem_forward.2} parent=27 // pred_region
        _
      $region44: #{stem_forward.2} parent=27 // pred_fallthru
        _
    $region28: #{stem_forward.2} parent=5 // pred_fallthru
      _
    %p1102 = scmp.le.s32.totalorder 2, %s10
    // Predicated region
    $region45: #{stem_forward.2} parent=5 // pred_check
      %p1103 = pneg %p1102
    $region46: #{stem_forward.2} parent=5 // pred_check_branch
      %1105 = sbr.rel (%p1103) target = $region48
    $region47: #{stem_forward.2} parent=5 // pred_region
      %s1106 = ssub.s32 %s10, 2
      // Predicated region
      $region49: #{stem_forward.2} parent=47 // pred_check
        %p1107 = pneg %p116
      $region50: #{stem_forward.2} parent=47 // pred_check_branch
        %1109 = sbr.rel (%p1107) target = $region52
      $region51: #{stem_forward.2} parent=47 // pred_region
        %s1110 = smul.u32 32, %s23
        %p1111 = scmp.lt.s32.totalorder %s1110, 63
        %s1112 = scalar_select %p1111, %s1110, 63
        %p1113 = scmp.lt.s32.totalorder %s24, 0
        %s1114 = scalar_select %p1113, %s24, 0
        %s1115 = sadd.s32 %s1114, %s1112
        %s1116 = smul.addr %s1115, 8
        %s1117 = scalar_lea.vmem %s2, %s1116
      $region52: #{stem_forward.2} parent=47 // pred_fallthru
        _
      // Predicated region
      $region53: #{stem_forward.2} parent=47 // pred_check
        %p1118 = pneg %p144
      $region54: #{stem_forward.2} parent=47 // pred_check_branch
        %1120 = sbr.rel (%p1118) target = $region56
      $region55: #{stem_forward.2} parent=47 // pred_region
        %p1121 = scmp.lt.s32.totalorder %s23, 1
        %s1122 = scalar_select %p1121, %s23, 1
        %p1123 = scmp.lt.s32.totalorder %s24, 0
        %s1124 = scalar_select %p1123, %s24, 0
        %s1125 = sadd.s32 %s1124, %s1122
        %s1126 = smul.addr %s1125, 8
        %s1127 = scalar_lea.vmem %s3, %s1126
      $region56: #{stem_forward.2} parent=47 // pred_fallthru
        _
    $region48: #{stem_forward.2} parent=5 // pred_fallthru
      _
  $region6: #{stem_forward.2} parent=0 // loop_footer
    %s14 = sadd.s32 1, %s10
  $region7: #{stem_forward.2} parent=0 // loop_footer_branch
    %9 = sbr.rel target = $region3
  $region8: #{stem_forward.2} parent=0 // loop_exit
    _

</llo_original>
